<compile_context>
chip_gen: v7x
topology: tpu7x:2x2x1
jax: 0.10.0
libtpu: 0.0.40
codegen_flags: <defaults>
</compile_context>

<pallas_src>
import jax
import jax.numpy as jnp
from jax.experimental import pallas as pl
from jax.experimental.pallas import tpu as pltpu


def _make_attention_kernel(cS: int):
    """Kernel factory; cS = static sequence chunk width (multiple of 128)."""

    def kernel(ph_ref, enc_ref, repl_ref, we_ref, v_ref, out_ref):
        s_idx = pl.program_id(1)
        n_s = pl.num_programs(1)

        tB, tS, De2 = enc_ref.shape
        Dd = ph_ref.shape[1]
        n_chunks = tS // cS

        ph_3d = ph_ref[...][:, None, :]          # (tB, 1, Dd)  decoder proj (+ bias)
        v_3d = v_ref[...][None, :, :]            # (1, 1, Dd)
        we = we_ref[...]                         # (De2, Dd)    (bf16 or f32)

        def chunk_body(c, carry):
            col = pl.multiple_of(c * cS, 128)
            enc_c = enc_ref[:, pl.ds(col, cS), :]                       # (tB, cS, De2)
            # One flat MXU matmul per chunk; f32 accumulation regardless of input dtype.
            pe = jnp.dot(enc_c.reshape(tB * cS, De2), we,
                         preferred_element_type=jnp.float32)            # (tB*cS, Dd)
            h = jnp.tanh(pe.reshape(tB, cS, Dd) + ph_3d)                # f32
            energy = jnp.sum(h * v_3d, axis=-1)                         # (tB, cS)
            # Single compare+select: repl is 0 (keep), -1e10 (masked) or -inf (pad lane).
            repl_c = repl_ref[:, pl.ds(col, cS)]
            energy = jnp.where(repl_c < -0.5, repl_c, energy)
            out_col = pl.multiple_of(s_idx * tS + col, 128)
            out_ref[:, pl.ds(out_col, cS)] = energy
            return carry

        jax.lax.fori_loop(0, n_chunks, chunk_body, 0, unroll=True)

        # Final S block: softmax over the full (padded) row, in the resident block.
        @pl.when(s_idx == n_s - 1)
        def _():
            e_all = out_ref[...]                                        # (tB, S_pad)
            m = jnp.max(e_all, axis=-1, keepdims=True)
            e = jnp.exp(e_all - m)
            out_ref[...] = e / jnp.sum(e, axis=-1, keepdims=True)

    return kernel


def _round_up(x: int, m: int) -> int:
    return ((x + m - 1) // m) * m


def _vmem_estimate(tB, tS, S_pad, De2, Dd, cS, enc_bytes):
    enc_buf = 2 * tB * tS * De2 * enc_bytes        # double-buffered encoder block
    msk_buf = 2 * tB * tS * 4                      # double-buffered mask block
    out_buf = 2 * tB * S_pad * 4                   # resident energy / softmax row
    params = De2 * Dd * enc_bytes + tB * Dd * 4 + Dd * 4
    temps = 4 * tB * cS * max(Dd, 128) * 4         # pe / tanh / product chunk temps
    return enc_buf + msk_buf + out_buf + params + temps


def attention_pallas(last_h, encoder_outputs, padding_mask, w1, b1, v, *,
                     block_s=512, matmul_dtype=jnp.bfloat16):
    last_h = jnp.asarray(last_h, jnp.float32)
    encoder_outputs = jnp.asarray(encoder_outputs)
    w1 = jnp.asarray(w1, jnp.float32)
    b1 = jnp.asarray(b1, jnp.float32)
    v = jnp.asarray(v, jnp.float32)

    B, S, De2 = encoder_outputs.shape
    Dd = last_h.shape[1]

    # --- split concatenated-input weight; hoist the decoder projection + bias ------
    #   cat([last_h, enc], -1) @ W1 + b1 == (last_h @ W1[:Dd] + b1) + enc @ W1[Dd:]
    w_h = w1[:Dd, :]                                   # (Dd, Dd)
    w_e = w1[Dd:, :]                                   # (De2, Dd)
    ph = (last_h @ w_h + b1).astype(jnp.float32)       # (B, Dd): once, in XLA

    # MXU inputs in reduced precision; elementwise math stays f32.
    enc_mx = encoder_outputs.astype(matmul_dtype)
    w_e_mx = w_e.astype(matmul_dtype)
    enc_bytes = jnp.dtype(matmul_dtype).itemsize

    # --- single-select mask encoding: 0 keep / -1e10 masked / -inf sequence pad ----
    if padding_mask is None:
        mask_bool = jnp.zeros((B, S), jnp.bool_)
    else:
        mask_bool = jnp.asarray(padding_mask) != 0
    repl = jnp.where(mask_bool, jnp.float32(-1e10), jnp.float32(0.0))

    # --- tiling ---------------------------------------------------------------------
    B_pad = _round_up(B, 8)
    tB = 8 if B_pad >= 8 else B_pad
    # TODO(synk): with B_pad == 8 the batch grid has a single block, so v7x's second
    # TensorCore idles; an energies-only pass with both axes "parallel" plus a tiny
    # softmax pass would recover it for small-batch decoding.
    # TODO(synk): when Dd < 128 the tanh/v-reduce stage runs at Dd/128 lane occupancy;
    # a transposed (B, De2, S) inner layout would recover it at the cost of an extra
    # wrapper-side transpose of the (largest) encoder tensor.

    try:
        vmem_cap = int(pltpu.get_tpu_info().vmem_capacity_bytes)
    except Exception:
        vmem_cap = 64 * 1024 * 1024                    # conservative: v7x per-TC VMEM
    budget = int(vmem_cap * 0.7)

    def _cS(t):
        return min(t, 256 if t % 256 == 0 else 128)

    tS = max(128, min(_round_up(int(block_s), 128), _round_up(S, 128)))
    while tS > 128 and _vmem_estimate(tB, tS, _round_up(S, tS), De2, Dd,
                                      _cS(tS), enc_bytes) > budget:
        tS -= 128
    S_pad = _round_up(S, tS)
    cS = _cS(tS)

    # --- padding --------------------------------------------------------------------
    if S_pad != S:
        enc_mx = jnp.pad(enc_mx, ((0, 0), (0, S_pad - S), (0, 0)))
        repl = jnp.pad(repl, ((0, 0), (0, S_pad - S)),
                       constant_values=-jnp.inf)       # exact-zero softmax contribution
    if B_pad != B:
        enc_mx = jnp.pad(enc_mx, ((0, B_pad - B), (0, 0), (0, 0)))
        ph = jnp.pad(ph, ((0, B_pad - B), (0, 0)))
        # padded batch rows use the finite code: an all--inf row would softmax to NaN.
        repl = jnp.pad(repl, ((0, B_pad - B), (0, 0)), constant_values=-1e10)

    grid = (B_pad // tB, S_pad // tS)

    # Advisory cost hint for XLA's scheduler around this (often latency-bound) call.
    flops = 2 * B_pad * S_pad * De2 * Dd + 4 * B_pad * S_pad * Dd + 6 * B_pad * S_pad
    transcendentals = B_pad * S_pad * Dd + B_pad * S_pad              # tanh + exp
    bytes_accessed = (B_pad * S_pad * De2 * enc_bytes                 # encoder read
                      + 2 * 4 * B_pad * S_pad                         # mask + output
                      + 4 * B_pad * Dd + De2 * Dd * enc_bytes + 4 * Dd)

    need = _vmem_estimate(tB, tS, S_pad, De2, Dd, cS, enc_bytes)
    vmem_limit = int(min(vmem_cap, max(2 * need, 32 * 1024 * 1024)))

    out_padded = pl.pallas_call(
        _make_attention_kernel(cS),
        out_shape=jax.ShapeDtypeStruct((B_pad, S_pad), jnp.float32),
        grid=grid,
        in_specs=[
            pl.BlockSpec((tB, Dd), lambda b, s: (b, 0)),            # ph (decoder proj)
            pl.BlockSpec((tB, tS, De2), lambda b, s: (b, s, 0)),    # encoder outputs
            pl.BlockSpec((tB, tS), lambda b, s: (b, s)),            # mask replacement
            pl.BlockSpec((De2, Dd), lambda b, s: (0, 0)),           # w_e (broadcast)
            pl.BlockSpec((1, Dd), lambda b, s: (0, 0)),             # v   (broadcast)
        ],
        out_specs=pl.BlockSpec((tB, S_pad), lambda b, s: (b, 0)),   # resident across s
        compiler_params=pltpu.CompilerParams(
            dimension_semantics=("parallel", "arbitrary"),
            vmem_limit_bytes=vmem_limit),
        cost_estimate=pl.CostEstimate(
            flops=flops, transcendentals=transcendentals,
            bytes_accessed=bytes_accessed),
    )(ph, enc_mx, repl, w_e_mx, v)

    return out_padded[:B, :S]


def _reference_jax(last_h, enc, mask, w1, b1, v):
    B, S, _ = enc.shape
    last_rep = jnp.broadcast_to(last_h[:, None, :], (B, S, last_h.shape[1]))
    cat = jnp.concatenate([last_rep, enc], axis=-1)
    h = jnp.tanh(cat @ w1 + b1)
    energy = jnp.sum(h * v, axis=-1)
    energy = jnp.where(mask, -1e10, energy)
    return jax.nn.softmax(energy, axis=-1)


if __name__ == "__main__":
    # Small shapes consistent with the module's forward.
    B, S = 2, 8
    enc_h, dec_h = 16, 32
    de2 = 2 * enc_h                  # 32
    d_cat = de2 + dec_h              # 64

    key = jax.random.PRNGKey(0)
    k1, k2, k3, k4, k5 = jax.random.split(key, 5)

    last_h = jax.random.normal(k1, (B, dec_h), dtype=jnp.float32)
    encoder_outputs = jax.random.normal(k2, (B, S, de2), dtype=jnp.float32)

    # Deterministic padding mask: second sequence padded after position 5.
    lengths = jnp.array([S, 5], dtype=jnp.int32)
    positions = jnp.arange(S)[None, :]
    padding_mask = positions >= lengths[:, None]            # bool, True = padded

    # Deterministic parameter init (xavier-uniform-like). W1 stored as weight^T.
    lim1 = (6.0 / (d_cat + dec_h)) ** 0.5
    w1 = jax.random.uniform(k3, (d_cat, dec_h), minval=-lim1, maxval=lim1,
                            dtype=jnp.float32)
    b1 = jax.random.uniform(k4, (1, dec_h), minval=-1.0 / (d_cat ** 0.5),
                            maxval=1.0 / (d_cat ** 0.5), dtype=jnp.float32)
    limv = (6.0 / (dec_h + 1)) ** 0.5
    v = jax.random.uniform(k5, (1, dec_h), minval=-limv, maxval=limv,
                           dtype=jnp.float32)

    ref = _reference_jax(last_h, encoder_outputs, padding_mask, w1, b1, v)

    # Default path: bf16 MXU inputs (f32 accumulate / elementwise).
    out = attention_pallas(last_h, encoder_outputs, padding_mask, w1, b1, v)
    out = jax.block_until_ready(out)
    assert out.shape == (B, S)
    assert jnp.allclose(jnp.sum(out, axis=-1), jnp.ones((B,)), atol=1e-4)
    assert bool(jnp.all(out[1, 5:] < 1e-6))                 # masked positions ~ 0
    # bf16 matmul inputs -> small, documented quantization of the energies.
    assert jnp.allclose(out, ref, atol=3e-2, rtol=3e-2)

    # Exact-f32 path matches the reference tightly.
    out_f32 = attention_pallas(last_h, encoder_outputs, padding_mask, w1, b1, v,
                               matmul_dtype=jnp.float32)
    out_f32 = jax.block_until_ready(out_f32)
    assert jnp.allclose(out_f32, ref, atol=1e-4, rtol=1e-4)

    print("KERNEL_OK")
</pallas_src>

<mosaic_0001>
module attributes {stable_mosaic.version = 11 : i64} {
  func.func @kernel(%arg0: i32, %arg1: i32, %arg2: memref<8x32xf32, #tpu.memory_space<vmem>>, %arg3: memref<8x128x32xbf16, #tpu.memory_space<vmem>>, %arg4: memref<8x128xf32, #tpu.memory_space<vmem>>, %arg5: memref<32x32xbf16, #tpu.memory_space<vmem>>, %arg6: memref<1x32xf32, #tpu.memory_space<vmem>>, %arg7: memref<8x128xf32, #tpu.memory_space<vmem>>) attributes {dimension_semantics = [#tpu.dimension_semantics<parallel>, #tpu.dimension_semantics<arbitrary>], iteration_bounds = array<i64: 1, 1>, scalar_prefetch = 0 : i64, scratch_operands = 0 : i64, tpu.core_type = #tpu.core_type<tc>, window_params = [{transform_indices = @transform_0, window_bounds = array<i64: 8, 32>}, {transform_indices = @transform_1, window_bounds = array<i64: 8, 128, 32>}, {transform_indices = @transform_2, window_bounds = array<i64: 8, 128>}, {pipeline_mode = #tpu.pipeline_mode<synchronous>, transform_indices = @transform_3, window_bounds = array<i64: 32, 32>}, {pipeline_mode = #tpu.pipeline_mode<synchronous>, transform_indices = @transform_4, window_bounds = array<i64: 1, 32>}, {transform_indices = @transform_5, window_bounds = array<i64: 8, 128>}]} {
    %c0 = arith.constant 0 : index
    %c0_0 = arith.constant 0 : index
    %0 = vector.load %arg2[%c0, %c0_0] : memref<8x32xf32, #tpu.memory_space<vmem>>, vector<8x32xf32>
    %1 = vector.shape_cast %0 : vector<8x32xf32> to vector<8x1x32xf32>
    %c0_1 = arith.constant 0 : index
    %c0_2 = arith.constant 0 : index
    %2 = vector.load %arg6[%c0_1, %c0_2] : memref<1x32xf32, #tpu.memory_space<vmem>>, vector<1x32xf32>
    %3 = vector.shape_cast %2 : vector<1x32xf32> to vector<1x1x32xf32>
    %c0_3 = arith.constant 0 : index
    %c0_4 = arith.constant 0 : index
    %4 = vector.load %arg5[%c0_3, %c0_4] : memref<32x32xbf16, #tpu.memory_space<vmem>>, vector<32x32xbf16>
    %c0_i32 = arith.constant 0 : i32
    %c128_i32 = arith.constant 128 : i32
    %5 = arith.muli %c0_i32, %c128_i32 : i32
    %6 = tpu.assume_multiple %5, 128 : i32
    %c0_5 = arith.constant 0 : index
    %7 = arith.index_cast %6 : i32 to index
    %c0_6 = arith.constant 0 : index
    %8 = vector.load %arg3[%c0_5, %7, %c0_6] : memref<8x128x32xbf16, #tpu.memory_space<vmem>>, vector<8x128x32xbf16>
    %9 = vector.shape_cast %8 : vector<8x128x32xbf16> to vector<1024x32xbf16>
    %cst = arith.constant dense<0.000000e+00> : vector<1024x32xf32>
    %10 = tpu.matmul %9, %4, %cst {dimension_numbers = #tpu.dot_dimension_numbers<[1], [0], [0], [1], [0, 0, 1, 1], [], []>} : vector<1024x32xbf16>, vector<32x32xbf16>, vector<1024x32xf32> -> vector<1024x32xf32>
    %11 = vector.shape_cast %10 : vector<1024x32xf32> to vector<8x128x32xf32>
    %12 = vector.broadcast %1 : vector<8x1x32xf32> to vector<8x128x32xf32>
    %13 = arith.addf %11, %12 : vector<8x128x32xf32>
    %14 = math.tanh %13 : vector<8x128x32xf32>
    %15 = vector.broadcast %3 : vector<1x1x32xf32> to vector<8x128x32xf32>
    %16 = arith.mulf %14, %15 : vector<8x128x32xf32>
    %cst_7 = arith.constant dense<0.000000e+00> : vector<8x128xf32>
    %17 = vector.multi_reduction <add>, %16, %cst_7 [2] : vector<8x128x32xf32> to vector<8x128xf32>
    %c0_8 = arith.constant 0 : index
    %18 = arith.index_cast %6 : i32 to index
    %19 = vector.load %arg4[%c0_8, %18] : memref<8x128xf32, #tpu.memory_space<vmem>>, vector<8x128xf32>
    %cst_9 = arith.constant -5.000000e-01 : f32
    %20 = vector.broadcast %cst_9 : f32 to vector<8x128xf32>
    %21 = arith.cmpf olt, %19, %20 : vector<8x128xf32>
    %22 = arith.select %21, %19, %17 : vector<8x128xi1>, vector<8x128xf32>
    %c128_i32_10 = arith.constant 128 : i32
    %23 = arith.muli %arg1, %c128_i32_10 : i32
    %24 = arith.addi %23, %6 : i32
    %25 = tpu.assume_multiple %24, 128 : i32
    %c0_11 = arith.constant 0 : index
    %26 = arith.index_cast %25 : i32 to index
    %27 = vector.load %arg7[%c0_11, %26] : memref<8x128xf32, #tpu.memory_space<vmem>>, vector<8x128xf32>
    tpu.vector_store %arg7[%c0_11, %26], %22 {strides = array<i32>} : memref<8x128xf32, #tpu.memory_space<vmem>>, vector<8x128xf32>,
    %c1_i32 = arith.constant 1 : i32
    %c0_i32_12 = arith.constant 0 : i32
    %28 = arith.cmpi eq, %arg1, %c0_i32_12 : i32
    %29 = arith.extui %28 : i1 to i32
    %c0_i32_13 = arith.constant 0 : i32
    %30 = arith.cmpi ne, %29, %c0_i32_13 : i32
    scf.if %30 {
      %c0_14 = arith.constant 0 : index
      %c0_15 = arith.constant 0 : index
      %31 = vector.load %arg7[%c0_14, %c0_15] : memref<8x128xf32, #tpu.memory_space<vmem>>, vector<8x128xf32>
      %cst_16 = arith.constant dense<0xFF800000> : vector<8xf32>
      %32 = vector.multi_reduction <maximumf>, %31, %cst_16 [1] : vector<8x128xf32> to vector<8xf32>
      %33 = vector.shape_cast %32 : vector<8xf32> to vector<8x1xf32>
      %34 = vector.broadcast %33 : vector<8x1xf32> to vector<8x128xf32>
      %35 = arith.subf %31, %34 : vector<8x128xf32>
      %36 = math.exp %35 : vector<8x128xf32>
      %cst_17 = arith.constant dense<0.000000e+00> : vector<8xf32>
      %37 = vector.multi_reduction <add>, %36, %cst_17 [1] : vector<8x128xf32> to vector<8xf32>
      %38 = vector.shape_cast %37 : vector<8xf32> to vector<8x1xf32>
      %39 = vector.broadcast %38 : vector<8x1xf32> to vector<8x128xf32>
      %40 = arith.divf %36, %39 : vector<8x128xf32>
      %c0_18 = arith.constant 0 : index
      %c0_19 = arith.constant 0 : index
      %41 = vector.load %arg7[%c0_18, %c0_19] : memref<8x128xf32, #tpu.memory_space<vmem>>, vector<8x128xf32>
      tpu.vector_store %arg7[%c0_18, %c0_19], %40 {strides = array<i32>} : memref<8x128xf32, #tpu.memory_space<vmem>>, vector<8x128xf32>,
    } else {
    }
    return
  }
  func.func @transform_0(%arg0: i32, %arg1: i32) -> (i32, i32) {
    %c0_i32 = arith.constant 0 : i32
    %c0_i32_0 = arith.constant 0 : i32
    return %arg0, %c0_i32 : i32, i32
  }
  func.func @transform_1(%arg0: i32, %arg1: i32) -> (i32, i32, i32) {
    %c0_i32 = arith.constant 0 : i32
    %c0_i32_0 = arith.constant 0 : i32
    return %arg0, %arg1, %c0_i32 : i32, i32, i32
  }
  func.func @transform_2(%arg0: i32, %arg1: i32) -> (i32, i32) {
    %c0_i32 = arith.constant 0 : i32
    return %arg0, %arg1 : i32, i32
  }
  func.func @transform_3(%arg0: i32, %arg1: i32) -> (i32, i32) {
    %c0_i32 = arith.constant 0 : i32
    %c0_i32_0 = arith.constant 0 : i32
    %c0_i32_1 = arith.constant 0 : i32
    return %c0_i32, %c0_i32_0 : i32, i32
  }
  func.func @transform_4(%arg0: i32, %arg1: i32) -> (i32, i32) {
    %c0_i32 = arith.constant 0 : i32
    %c0_i32_0 = arith.constant 0 : i32
    %c0_i32_1 = arith.constant 0 : i32
    return %c0_i32, %c0_i32_0 : i32, i32
  }
  func.func @transform_5(%arg0: i32, %arg1: i32) -> (i32, i32) {
    %c0_i32 = arith.constant 0 : i32
    %c0_i32_0 = arith.constant 0 : i32
    return %arg0, %c0_i32 : i32, i32
  }
}

</mosaic_0001>

<llo_original>
// kernel: tpu_custom_call.1
$region0: #{tpu_custom_call.1}
  #allocation0 [shape = 'u32[]', space=smem, size = 0x4, offset = 0x4, fixed_abs, tag = 'smem constant byte address 0x4 - core index']
  #allocation1 [shape = 'u32[144,128]{1,0:T(1,128)}', space=vmem, size = 0x12000, scoped, tag = 'internal scratch']
  %s0 = inlined_call_operand.vmem [shape: f32[8,32], index: 0, kind: input, shape index: {}]
  %s1 = inlined_call_operand.vmem [shape: bf16[8,128,32], index: 1, kind: input, shape index: {}]
  %s2 = inlined_call_operand.vmem [shape: f32[8,128], index: 2, kind: input, shape index: {}]
  %s3 = inlined_call_operand.vmem [shape: bf16[32,32], index: 3, kind: input, shape index: {}]
  %s4 = inlined_call_operand.vmem [shape: f32[1,32], index: 4, kind: input, shape index: {}]
  %s5 = inlined_call_operand.hbm [shape: f32[8,128], index: 5, kind: output, shape index: {}]
  %s6 = sld [smem:[#allocation0]]
  $region34: #{tpu_custom_call.1} parent=0
    _
  %s8 = ssub.s32 1, %s6
  %s9 = scalar_select 0, %s8, %s6
  $region1: #{tpu_custom_call.1} parent=0
    #allocation2 [shape = 'u8[4096]{0}', space=vmem, size = 0x1000, scoped, tag = 'output window, operand 0, single buffered']
    #allocation3 [shape = 's32[1]{0}', space=sflag, size = 0x4, scoped, tag = 'scoped memory for tpu_custom_call.1']
    %10 = vsyncpa [#allocation3], 0
    // Predicated region
    $region2: #{tpu_custom_call.1} parent=1 // pred_check
      _
    $region3: #{tpu_custom_call.1} parent=1 // pred_check_branch
      %12 = sbr.rel (0) target = $region5
    $region4: #{tpu_custom_call.1} parent=1 // pred_region
      _
    $region5: #{tpu_custom_call.1} parent=1 // pred_fallthru
      _
    // Predicated region
    $region6: #{tpu_custom_call.1} parent=1 // pred_check
      _
    $region7: #{tpu_custom_call.1} parent=1 // pred_check_branch
      %14 = sbr.rel (0) target = $region9
    $region8: #{tpu_custom_call.1} parent=1 // pred_region
      _
    $region9: #{tpu_custom_call.1} parent=1 // pred_fallthru
      _
    // Predicated region
    $region10: #{tpu_custom_call.1} parent=1 // pred_check
      _
    $region11: #{tpu_custom_call.1} parent=1 // pred_check_branch
      %16 = sbr.rel (0) target = $region13
    $region12: #{tpu_custom_call.1} parent=1 // pred_region
      _
    $region13: #{tpu_custom_call.1} parent=1 // pred_fallthru
      _
    // Predicated region
    $region14: #{tpu_custom_call.1} parent=1 // pred_check
      _
    $region15: #{tpu_custom_call.1} parent=1 // pred_check_branch
      %18 = sbr.rel (0) target = $region17
    $region16: #{tpu_custom_call.1} parent=1 // pred_region
      _
    $region17: #{tpu_custom_call.1} parent=1 // pred_fallthru
      _
    // Predicated region
    $region18: #{tpu_custom_call.1} parent=1 // pred_check
      _
    $region19: #{tpu_custom_call.1} parent=1 // pred_check_branch
      %20 = sbr.rel (0) target = $region21
    $region20: #{tpu_custom_call.1} parent=1 // pred_region
      _
    $region21: #{tpu_custom_call.1} parent=1 // pred_fallthru
      _
    %v22 = vld [vmem:[%s0] sm:$0xff]
    %v24 = vcombine.high %v22, %v22
    %v26 = vunpack.c.l.s4 1966171168
    %v27 = vunpack.c.0.s8 %v26
    %v28 = vlaneseq
    %v29 = vshrl.u32 %v28, 7
    %v30 = vsub.s32 %v27, %v29
    %v31 = vrot.slane %v22, %v30
    %v33 = vunpack.c.l.s4 1966171168
    %v34 = vunpack.c.0.s8 %v33
    %v35 = vlaneseq
    %v36 = vshrl.u32 %v35, 7
    %v37 = vsub.s32 %v34, %v36
    %v38 = vrot.slane %v24, %v37
    %v39 = vcombine.high %v31, %v31
    %v40 = vcombine.high %v38, %v38
    %v42 = vunpack.c.l.s4 1966171168
    %v43 = vunpack.c.0.s8 %v42
    %v44 = vlaneseq
    %v45 = vshrl.u32 %v44, 7
    %v46 = vsub.s32 %v43, %v45
    %v47 = vrot.slane %v31, %v46
    %v49 = vunpack.c.l.s4 1966171168
    %v50 = vunpack.c.0.s8 %v49
    %v51 = vlaneseq
    %v52 = vshrl.u32 %v51, 7
    %v53 = vsub.s32 %v50, %v52
    %v54 = vrot.slane %v38, %v53
    %v56 = vunpack.c.l.s4 1966171168
    %v57 = vunpack.c.0.s8 %v56
    %v58 = vlaneseq
    %v59 = vshrl.u32 %v58, 7
    %v60 = vsub.s32 %v57, %v59
    %v61 = vrot.slane %v39, %v60
    %v63 = vunpack.c.l.s4 1966171168
    %v64 = vunpack.c.0.s8 %v63
    %v65 = vlaneseq
    %v66 = vshrl.u32 %v65, 7
    %v67 = vsub.s32 %v64, %v66
    %v68 = vrot.slane %v40, %v67
    %v69 = vcombine.high %v47, %v47
    %v70 = vcombine.high %v54, %v54
    %v71 = vcombine.high %v61, %v61
    %v72 = vcombine.high %v68, %v68
    %v73 = vld [vmem:[%s4] sm:$0x1]
    %v74 = vld [vmem:[%s3] sm:$0xf]
    %v75 = vld [vmem:[%s3 + $0x4] sm:$0xf]
    %v76 = vld [vmem:[%s3 + $0x8] sm:$0xf]
    %v77 = vld [vmem:[%s3 + $0xc] sm:$0xf]
    %v78 = vld [vmem:[%s1] sm:$0xf]
    %v79 = vld [vmem:[%s1 + $0x4] sm:$0xf]
    %v80 = vld [vmem:[%s1 + $0x8] sm:$0xf]
    %v81 = vld [vmem:[%s1 + $0xc] sm:$0xf]
    %v82 = vld [vmem:[%s1 + $0x10] sm:$0xf]
    %v83 = vld [vmem:[%s1 + $0x14] sm:$0xf]
    %v84 = vld [vmem:[%s1 + $0x18] sm:$0xf]
    %v85 = vld [vmem:[%s1 + $0x1c] sm:$0xf]
    %v86 = vld [vmem:[%s1 + $0x20] sm:$0xf]
    %v87 = vld [vmem:[%s1 + $0x24] sm:$0xf]
    %v88 = vld [vmem:[%s1 + $0x28] sm:$0xf]
    %v89 = vld [vmem:[%s1 + $0x2c] sm:$0xf]
    %v90 = vld [vmem:[%s1 + $0x30] sm:$0xf]
    %v91 = vld [vmem:[%s1 + $0x34] sm:$0xf]
    %v92 = vld [vmem:[%s1 + $0x38] sm:$0xf]
    %v93 = vld [vmem:[%s1 + $0x3c] sm:$0xf]
    %v94 = vld [vmem:[%s1 + $0x40] sm:$0xf]
    %v95 = vld [vmem:[%s1 + $0x44] sm:$0xf]
    %v96 = vld [vmem:[%s1 + $0x48] sm:$0xf]
    %v97 = vld [vmem:[%s1 + $0x4c] sm:$0xf]
    %v98 = vld [vmem:[%s1 + $0x50] sm:$0xf]
    %v99 = vld [vmem:[%s1 + $0x54] sm:$0xf]
    %v100 = vld [vmem:[%s1 + $0x58] sm:$0xf]
    %v101 = vld [vmem:[%s1 + $0x5c] sm:$0xf]
    %v102 = vld [vmem:[%s1 + $0x60] sm:$0xf]
    %v103 = vld [vmem:[%s1 + $0x64] sm:$0xf]
    %v104 = vld [vmem:[%s1 + $0x68] sm:$0xf]
    %v105 = vld [vmem:[%s1 + $0x6c] sm:$0xf]
    %v106 = vld [vmem:[%s1 + $0x70] sm:$0xf]
    %v107 = vld [vmem:[%s1 + $0x74] sm:$0xf]
    %v108 = vld [vmem:[%s1 + $0x78] sm:$0xf]
    %v109 = vld [vmem:[%s1 + $0x7c] sm:$0xf]
    %v110 = vld [vmem:[%s1 + $0x80] sm:$0xf]
    %v111 = vld [vmem:[%s1 + $0x84] sm:$0xf]
    %v112 = vld [vmem:[%s1 + $0x88] sm:$0xf]
    %v113 = vld [vmem:[%s1 + $0x8c] sm:$0xf]
    %v114 = vld [vmem:[%s1 + $0x90] sm:$0xf]
    %v115 = vld [vmem:[%s1 + $0x94] sm:$0xf]
    %v116 = vld [vmem:[%s1 + $0x98] sm:$0xf]
    %v117 = vld [vmem:[%s1 + $0x9c] sm:$0xf]
    %v118 = vld [vmem:[%s1 + $0xa0] sm:$0xf]
    %v119 = vld [vmem:[%s1 + $0xa4] sm:$0xf]
    %v120 = vld [vmem:[%s1 + $0xa8] sm:$0xf]
    %v121 = vld [vmem:[%s1 + $0xac] sm:$0xf]
    %v122 = vld [vmem:[%s1 + $0xb0] sm:$0xf]
    %v123 = vld [vmem:[%s1 + $0xb4] sm:$0xf]
    %v124 = vld [vmem:[%s1 + $0xb8] sm:$0xf]
    %v125 = vld [vmem:[%s1 + $0xbc] sm:$0xf]
    %v126 = vld [vmem:[%s1 + $0xc0] sm:$0xf]
    %v127 = vld [vmem:[%s1 + $0xc4] sm:$0xf]
    %v128 = vld [vmem:[%s1 + $0xc8] sm:$0xf]
    %v129 = vld [vmem:[%s1 + $0xcc] sm:$0xf]
    %v130 = vld [vmem:[%s1 + $0xd0] sm:$0xf]
    %v131 = vld [vmem:[%s1 + $0xd4] sm:$0xf]
    %v132 = vld [vmem:[%s1 + $0xd8] sm:$0xf]
    %v133 = vld [vmem:[%s1 + $0xdc] sm:$0xf]
    %v134 = vld [vmem:[%s1 + $0xe0] sm:$0xf]
    %v135 = vld [vmem:[%s1 + $0xe4] sm:$0xf]
    %v136 = vld [vmem:[%s1 + $0xe8] sm:$0xf]
    %v137 = vld [vmem:[%s1 + $0xec] sm:$0xf]
    %v138 = vld [vmem:[%s1 + $0xf0] sm:$0xf]
    %v139 = vld [vmem:[%s1 + $0xf4] sm:$0xf]
    %v140 = vld [vmem:[%s1 + $0xf8] sm:$0xf]
    %v141 = vld [vmem:[%s1 + $0xfc] sm:$0xf]
    %v142 = vld [vmem:[%s1 + $0x100] sm:$0xf]
    %v143 = vld [vmem:[%s1 + $0x104] sm:$0xf]
    %v144 = vld [vmem:[%s1 + $0x108] sm:$0xf]
    %v145 = vld [vmem:[%s1 + $0x10c] sm:$0xf]
    %v146 = vld [vmem:[%s1 + $0x110] sm:$0xf]
    %v147 = vld [vmem:[%s1 + $0x114] sm:$0xf]
    %v148 = vld [vmem:[%s1 + $0x118] sm:$0xf]
    %v149 = vld [vmem:[%s1 + $0x11c] sm:$0xf]
    %v150 = vld [vmem:[%s1 + $0x120] sm:$0xf]
    %v151 = vld [vmem:[%s1 + $0x124] sm:$0xf]
    %v152 = vld [vmem:[%s1 + $0x128] sm:$0xf]
    %v153 = vld [vmem:[%s1 + $0x12c] sm:$0xf]
    %v154 = vld [vmem:[%s1 + $0x130] sm:$0xf]
    %v155 = vld [vmem:[%s1 + $0x134] sm:$0xf]
    %v156 = vld [vmem:[%s1 + $0x138] sm:$0xf]
    %v157 = vld [vmem:[%s1 + $0x13c] sm:$0xf]
    %v158 = vld [vmem:[%s1 + $0x140] sm:$0xf]
    %v159 = vld [vmem:[%s1 + $0x144] sm:$0xf]
    %v160 = vld [vmem:[%s1 + $0x148] sm:$0xf]
    %v161 = vld [vmem:[%s1 + $0x14c] sm:$0xf]
    %v162 = vld [vmem:[%s1 + $0x150] sm:$0xf]
    %v163 = vld [vmem:[%s1 + $0x154] sm:$0xf]
    %v164 = vld [vmem:[%s1 + $0x158] sm:$0xf]
    %v165 = vld [vmem:[%s1 + $0x15c] sm:$0xf]
    %v166 = vld [vmem:[%s1 + $0x160] sm:$0xf]
    %v167 = vld [vmem:[%s1 + $0x164] sm:$0xf]
    %v168 = vld [vmem:[%s1 + $0x168] sm:$0xf]
    %v169 = vld [vmem:[%s1 + $0x16c] sm:$0xf]
    %v170 = vld [vmem:[%s1 + $0x170] sm:$0xf]
    %v171 = vld [vmem:[%s1 + $0x174] sm:$0xf]
    %v172 = vld [vmem:[%s1 + $0x178] sm:$0xf]
    %v173 = vld [vmem:[%s1 + $0x17c] sm:$0xf]
    %v174 = vld [vmem:[%s1 + $0x180] sm:$0xf]
    %v175 = vld [vmem:[%s1 + $0x184] sm:$0xf]
    %v176 = vld [vmem:[%s1 + $0x188] sm:$0xf]
    %v177 = vld [vmem:[%s1 + $0x18c] sm:$0xf]
    %v178 = vld [vmem:[%s1 + $0x190] sm:$0xf]
    %v179 = vld [vmem:[%s1 + $0x194] sm:$0xf]
    %v180 = vld [vmem:[%s1 + $0x198] sm:$0xf]
    %v181 = vld [vmem:[%s1 + $0x19c] sm:$0xf]
    %v182 = vld [vmem:[%s1 + $0x1a0] sm:$0xf]
    %v183 = vld [vmem:[%s1 + $0x1a4] sm:$0xf]
    %v184 = vld [vmem:[%s1 + $0x1a8] sm:$0xf]
    %v185 = vld [vmem:[%s1 + $0x1ac] sm:$0xf]
    %v186 = vld [vmem:[%s1 + $0x1b0] sm:$0xf]
    %v187 = vld [vmem:[%s1 + $0x1b4] sm:$0xf]
    %v188 = vld [vmem:[%s1 + $0x1b8] sm:$0xf]
    %v189 = vld [vmem:[%s1 + $0x1bc] sm:$0xf]
    %v190 = vld [vmem:[%s1 + $0x1c0] sm:$0xf]
    %v191 = vld [vmem:[%s1 + $0x1c4] sm:$0xf]
    %v192 = vld [vmem:[%s1 + $0x1c8] sm:$0xf]
    %v193 = vld [vmem:[%s1 + $0x1cc] sm:$0xf]
    %v194 = vld [vmem:[%s1 + $0x1d0] sm:$0xf]
    %v195 = vld [vmem:[%s1 + $0x1d4] sm:$0xf]
    %v196 = vld [vmem:[%s1 + $0x1d8] sm:$0xf]
    %v197 = vld [vmem:[%s1 + $0x1dc] sm:$0xf]
    %v198 = vld [vmem:[%s1 + $0x1e0] sm:$0xf]
    %v199 = vld [vmem:[%s1 + $0x1e4] sm:$0xf]
    %v200 = vld [vmem:[%s1 + $0x1e8] sm:$0xf]
    %v201 = vld [vmem:[%s1 + $0x1ec] sm:$0xf]
    %v202 = vld [vmem:[%s1 + $0x1f0] sm:$0xf]
    %v203 = vld [vmem:[%s1 + $0x1f4] sm:$0xf]
    %v204 = vld [vmem:[%s1 + $0x1f8] sm:$0xf]
    %v205 = vld [vmem:[%s1 + $0x1fc] sm:$0xf]
    %v334 = vunpack.c.l.b16 %v78
    %v335 = vunpack.c.l.b16 %v79
    %v336 = vunpack.c.l.b16 %v80
    %v337 = vunpack.c.l.b16 %v81
    %v338 = vunpack.c.l.b16 %v82
    %v339 = vunpack.c.l.b16 %v83
    %v340 = vunpack.c.l.b16 %v84
    %v341 = vunpack.c.l.b16 %v85
    %v342 = vunpack.c.l.b16 %v86
    %v343 = vunpack.c.l.b16 %v87
    %v344 = vunpack.c.l.b16 %v88
    %v345 = vunpack.c.l.b16 %v89
    %v346 = vunpack.c.l.b16 %v90
    %v347 = vunpack.c.l.b16 %v91
    %v348 = vunpack.c.l.b16 %v92
    %v349 = vunpack.c.l.b16 %v93
    %v350 = vunpack.c.l.b16 %v94
    %v351 = vunpack.c.l.b16 %v95
    %v352 = vunpack.c.l.b16 %v96
    %v353 = vunpack.c.l.b16 %v97
    %v354 = vunpack.c.l.b16 %v98
    %v355 = vunpack.c.l.b16 %v99
    %v356 = vunpack.c.l.b16 %v100
    %v357 = vunpack.c.l.b16 %v101
    %v358 = vunpack.c.l.b16 %v102
    %v359 = vunpack.c.l.b16 %v103
    %v360 = vunpack.c.l.b16 %v104
    %v361 = vunpack.c.l.b16 %v105
    %v362 = vunpack.c.l.b16 %v106
    %v363 = vunpack.c.l.b16 %v107
    %v364 = vunpack.c.l.b16 %v108
    %v365 = vunpack.c.l.b16 %v109
    %v366 = vunpack.c.l.b16 %v110
    %v367 = vunpack.c.l.b16 %v111
    %v368 = vunpack.c.l.b16 %v112
    %v369 = vunpack.c.l.b16 %v113
    %v370 = vunpack.c.l.b16 %v114
    %v371 = vunpack.c.l.b16 %v115
    %v372 = vunpack.c.l.b16 %v116
    %v373 = vunpack.c.l.b16 %v117
    %v374 = vunpack.c.l.b16 %v118
    %v375 = vunpack.c.l.b16 %v119
    %v376 = vunpack.c.l.b16 %v120
    %v377 = vunpack.c.l.b16 %v121
    %v378 = vunpack.c.l.b16 %v122
    %v379 = vunpack.c.l.b16 %v123
    %v380 = vunpack.c.l.b16 %v124
    %v381 = vunpack.c.l.b16 %v125
    %v382 = vunpack.c.l.b16 %v126
    %v383 = vunpack.c.l.b16 %v127
    %v384 = vunpack.c.l.b16 %v128
    %v385 = vunpack.c.l.b16 %v129
    %v386 = vunpack.c.l.b16 %v130
    %v387 = vunpack.c.l.b16 %v131
    %v388 = vunpack.c.l.b16 %v132
    %v389 = vunpack.c.l.b16 %v133
    %v390 = vunpack.c.l.b16 %v134
    %v391 = vunpack.c.l.b16 %v135
    %v392 = vunpack.c.l.b16 %v136
    %v393 = vunpack.c.l.b16 %v137
    %v394 = vunpack.c.l.b16 %v138
    %v395 = vunpack.c.l.b16 %v139
    %v396 = vunpack.c.l.b16 %v140
    %v397 = vunpack.c.l.b16 %v141
    %v398 = vunpack.c.l.b16 %v142
    %v399 = vunpack.c.l.b16 %v143
    %v400 = vunpack.c.l.b16 %v144
    %v401 = vunpack.c.l.b16 %v145
    %v402 = vunpack.c.l.b16 %v146
    %v403 = vunpack.c.l.b16 %v147
    %v404 = vunpack.c.l.b16 %v148
    %v405 = vunpack.c.l.b16 %v149
    %v406 = vunpack.c.l.b16 %v150
    %v407 = vunpack.c.l.b16 %v151
    %v408 = vunpack.c.l.b16 %v152
    %v409 = vunpack.c.l.b16 %v153
    %v410 = vunpack.c.l.b16 %v154
    %v411 = vunpack.c.l.b16 %v155
    %v412 = vunpack.c.l.b16 %v156
    %v413 = vunpack.c.l.b16 %v157
    %v414 = vunpack.c.l.b16 %v158
    %v415 = vunpack.c.l.b16 %v159
    %v416 = vunpack.c.l.b16 %v160
    %v417 = vunpack.c.l.b16 %v161
    %v418 = vunpack.c.l.b16 %v162
    %v419 = vunpack.c.l.b16 %v163
    %v420 = vunpack.c.l.b16 %v164
    %v421 = vunpack.c.l.b16 %v165
    %v422 = vunpack.c.l.b16 %v166
    %v423 = vunpack.c.l.b16 %v167
    %v424 = vunpack.c.l.b16 %v168
    %v425 = vunpack.c.l.b16 %v169
    %v426 = vunpack.c.l.b16 %v170
    %v427 = vunpack.c.l.b16 %v171
    %v428 = vunpack.c.l.b16 %v172
    %v429 = vunpack.c.l.b16 %v173
    %v430 = vunpack.c.l.b16 %v174
    %v431 = vunpack.c.l.b16 %v175
    %v432 = vunpack.c.l.b16 %v176
    %v433 = vunpack.c.l.b16 %v177
    %v434 = vunpack.c.l.b16 %v178
    %v435 = vunpack.c.l.b16 %v179
    %v436 = vunpack.c.l.b16 %v180
    %v437 = vunpack.c.l.b16 %v181
    %v438 = vunpack.c.l.b16 %v182
    %v439 = vunpack.c.l.b16 %v183
    %v440 = vunpack.c.l.b16 %v184
    %v441 = vunpack.c.l.b16 %v185
    %v442 = vunpack.c.l.b16 %v186
    %v443 = vunpack.c.l.b16 %v187
    %v444 = vunpack.c.l.b16 %v188
    %v445 = vunpack.c.l.b16 %v189
    %v446 = vunpack.c.l.b16 %v190
    %v447 = vunpack.c.l.b16 %v191
    %v448 = vunpack.c.l.b16 %v192
    %v449 = vunpack.c.l.b16 %v193
    %v450 = vunpack.c.l.b16 %v194
    %v451 = vunpack.c.l.b16 %v195
    %v452 = vunpack.c.l.b16 %v196
    %v453 = vunpack.c.l.b16 %v197
    %v454 = vunpack.c.l.b16 %v198
    %v455 = vunpack.c.l.b16 %v199
    %v456 = vunpack.c.l.b16 %v200
    %v457 = vunpack.c.l.b16 %v201
    %v458 = vunpack.c.l.b16 %v202
    %v459 = vunpack.c.l.b16 %v203
    %v460 = vunpack.c.l.b16 %v204
    %v461 = vunpack.c.l.b16 %v205
    %v462 = vpack.c.b16 %v335, %v334
    %v463 = vpack.c.b16 %v337, %v336
    %v464 = vpack.c.b16 %v339, %v338
    %v465 = vpack.c.b16 %v341, %v340
    %v466 = vpack.c.b16 %v343, %v342
    %v467 = vpack.c.b16 %v345, %v344
    %v468 = vpack.c.b16 %v347, %v346
    %v469 = vpack.c.b16 %v349, %v348
    %v470 = vpack.c.b16 %v351, %v350
    %v471 = vpack.c.b16 %v353, %v352
    %v472 = vpack.c.b16 %v355, %v354
    %v473 = vpack.c.b16 %v357, %v356
    %v474 = vpack.c.b16 %v359, %v358
    %v475 = vpack.c.b16 %v361, %v360
    %v476 = vpack.c.b16 %v363, %v362
    %v477 = vpack.c.b16 %v365, %v364
    %v478 = vpack.c.b16 %v367, %v366
    %v479 = vpack.c.b16 %v369, %v368
    %v480 = vpack.c.b16 %v371, %v370
    %v481 = vpack.c.b16 %v373, %v372
    %v482 = vpack.c.b16 %v375, %v374
    %v483 = vpack.c.b16 %v377, %v376
    %v484 = vpack.c.b16 %v379, %v378
    %v485 = vpack.c.b16 %v381, %v380
    %v486 = vpack.c.b16 %v383, %v382
    %v487 = vpack.c.b16 %v385, %v384
    %v488 = vpack.c.b16 %v387, %v386
    %v489 = vpack.c.b16 %v389, %v388
    %v490 = vpack.c.b16 %v391, %v390
    %v491 = vpack.c.b16 %v393, %v392
    %v492 = vpack.c.b16 %v395, %v394
    %v493 = vpack.c.b16 %v397, %v396
    %v494 = vpack.c.b16 %v399, %v398
    %v495 = vpack.c.b16 %v401, %v400
    %v496 = vpack.c.b16 %v403, %v402
    %v497 = vpack.c.b16 %v405, %v404
    %v498 = vpack.c.b16 %v407, %v406
    %v499 = vpack.c.b16 %v409, %v408
    %v500 = vpack.c.b16 %v411, %v410
    %v501 = vpack.c.b16 %v413, %v412
    %v502 = vpack.c.b16 %v415, %v414
    %v503 = vpack.c.b16 %v417, %v416
    %v504 = vpack.c.b16 %v419, %v418
    %v505 = vpack.c.b16 %v421, %v420
    %v506 = vpack.c.b16 %v423, %v422
    %v507 = vpack.c.b16 %v425, %v424
    %v508 = vpack.c.b16 %v427, %v426
    %v509 = vpack.c.b16 %v429, %v428
    %v510 = vpack.c.b16 %v431, %v430
    %v511 = vpack.c.b16 %v433, %v432
    %v512 = vpack.c.b16 %v435, %v434
    %v513 = vpack.c.b16 %v437, %v436
    %v514 = vpack.c.b16 %v439, %v438
    %v515 = vpack.c.b16 %v441, %v440
    %v516 = vpack.c.b16 %v443, %v442
    %v517 = vpack.c.b16 %v445, %v444
    %v518 = vpack.c.b16 %v447, %v446
    %v519 = vpack.c.b16 %v449, %v448
    %v520 = vpack.c.b16 %v451, %v450
    %v521 = vpack.c.b16 %v453, %v452
    %v522 = vpack.c.b16 %v455, %v454
    %v523 = vpack.c.b16 %v457, %v456
    %v524 = vpack.c.b16 %v459, %v458
    %v525 = vpack.c.b16 %v461, %v460
    %v530 = vunpack.c.l.b16 %v74
    %v531 = vunpack.c.l.b16 %v75
    %v532 = vunpack.c.l.b16 %v76
    %v533 = vunpack.c.l.b16 %v77
    %v534 = vpack.c.b16 %v531, %v530
    %v535 = vpack.c.b16 %v533, %v532
    %vm538 = vcmask 261120
    %v540 = vsel %vm538, %v462, 0
    %v543 = vsel %vm538, %v463, 0
    %v546 = vsel %vm538, %v464, 0
    %v549 = vsel %vm538, %v465, 0
    %v552 = vsel %vm538, %v466, 0
    %v555 = vsel %vm538, %v467, 0
    %v558 = vsel %vm538, %v468, 0
    %v561 = vsel %vm538, %v469, 0
    %v564 = vsel %vm538, %v470, 0
    %v567 = vsel %vm538, %v471, 0
    %v570 = vsel %vm538, %v472, 0
    %v573 = vsel %vm538, %v473, 0
    %v576 = vsel %vm538, %v474, 0
    %v579 = vsel %vm538, %v475, 0
    %v582 = vsel %vm538, %v476, 0
    %v585 = vsel %vm538, %v477, 0
    %v588 = vsel %vm538, %v478, 0
    %v591 = vsel %vm538, %v479, 0
    %v594 = vsel %vm538, %v480, 0
    %v597 = vsel %vm538, %v481, 0
    %v600 = vsel %vm538, %v482, 0
    %v603 = vsel %vm538, %v483, 0
    %v606 = vsel %vm538, %v484, 0
    %v609 = vsel %vm538, %v485, 0
    %v612 = vsel %vm538, %v486, 0
    %v615 = vsel %vm538, %v487, 0
    %v618 = vsel %vm538, %v488, 0
    %v621 = vsel %vm538, %v489, 0
    %v624 = vsel %vm538, %v490, 0
    %v627 = vsel %vm538, %v491, 0
    %v630 = vsel %vm538, %v492, 0
    %v633 = vsel %vm538, %v493, 0
    %v636 = vsel %vm538, %v494, 0
    %v639 = vsel %vm538, %v495, 0
    %v642 = vsel %vm538, %v496, 0
    %v645 = vsel %vm538, %v497, 0
    %v648 = vsel %vm538, %v498, 0
    %v651 = vsel %vm538, %v499, 0
    %v654 = vsel %vm538, %v500, 0
    %v657 = vsel %vm538, %v501, 0
    %v660 = vsel %vm538, %v502, 0
    %v663 = vsel %vm538, %v503, 0
    %v666 = vsel %vm538, %v504, 0
    %v669 = vsel %vm538, %v505, 0
    %v672 = vsel %vm538, %v506, 0
    %v675 = vsel %vm538, %v507, 0
    %v678 = vsel %vm538, %v508, 0
    %v681 = vsel %vm538, %v509, 0
    %v684 = vsel %vm538, %v510, 0
    %v687 = vsel %vm538, %v511, 0
    %v690 = vsel %vm538, %v512, 0
    %v693 = vsel %vm538, %v513, 0
    %v696 = vsel %vm538, %v514, 0
    %v699 = vsel %vm538, %v515, 0
    %v702 = vsel %vm538, %v516, 0
    %v705 = vsel %vm538, %v517, 0
    %v708 = vsel %vm538, %v518, 0
    %v711 = vsel %vm538, %v519, 0
    %v714 = vsel %vm538, %v520, 0
    %v717 = vsel %vm538, %v521, 0
    %v720 = vsel %vm538, %v522, 0
    %v723 = vsel %vm538, %v523, 0
    %v726 = vsel %vm538, %v524, 0
    %v729 = vsel %vm538, %v525, 0
    %731 = vmatprep.subr.bf16.mxu0 0
    %732 = vmatpush1.bf16.msra.mxu0 %v534
    %733 = vmatprep.subr.bf16.mxu0 0
    %734 = vmatpush1.bf16.msra.mxu0 %v535
    %735 = vmatprep.subr.bf16.mxu0 0
    %736 = vmatpush1.bf16.msra.mxu0 0
    %737 = vmatprep.subr.bf16.mxu0 0
    %738 = vmatpush1.bf16.msra.mxu0 0
    %739 = vmatprep.subr.bf16.mxu0 0
    %740 = vmatpush1.bf16.msra.mxu0 0
    %741 = vmatprep.subr.bf16.mxu0 0
    %742 = vmatpush1.bf16.msra.mxu0 0
    %743 = vmatprep.subr.bf16.mxu0 0
    %744 = vmatpush1.bf16.msra.mxu0 0
    %745 = vmatprep.subr.bf16.mxu0 0
    %746 = vmatpush1.bf16.msra.mxu0 0
    %747 = vmatprep.subr.bf16.mxu0 0
    %748 = vmatpush1.bf16.msra.mxu0 0
    %749 = vmatprep.subr.bf16.mxu0 0
    %750 = vmatpush1.bf16.msra.mxu0 0
    %751 = vmatprep.subr.bf16.mxu0 0
    %752 = vmatpush1.bf16.msra.mxu0 0
    %753 = vmatprep.subr.bf16.mxu0 0
    %754 = vmatpush1.bf16.msra.mxu0 0
    %755 = vmatprep.subr.bf16.mxu0 0
    %756 = vmatpush1.bf16.msra.mxu0 0
    %757 = vmatprep.subr.bf16.mxu0 0
    %758 = vmatpush1.bf16.msra.mxu0 0
    %759 = vmatprep.subr.bf16.mxu0 0
    %760 = vmatpush1.bf16.msra.mxu0 0
    %761 = vmatprep.subr.bf16.mxu0 0
    %762 = vmatpush1.bf16.msra.mxu0 0
    %763 = vmatprep.mubr.bf16.mxu0 0
    %764 = vmatmul.mubr.bf16.gmra.mrb[0].mxu0 %v540
    %v765 = vpop.f32.mrb[0].mxu0
    %v766 = vadd.f32 0.0, %v765
    %v767 = vpop.f32.mrb[0].mxu0
    %v768 = vpop.f32.mrb[0].mxu0
    %v769 = vadd.f32 0.0, %v768
    %v770 = vpop.f32.mrb[0].mxu0
    %771 = vmatprep.mubr.bf16.mxu0 0
    %772 = vmatmul.mubr.bf16.gmra.mrb[0].mxu0 %v543
    %v773 = vpop.f32.mrb[0].mxu0
    %v774 = vadd.f32 0.0, %v773
    %v775 = vpop.f32.mrb[0].mxu0
    %v776 = vpop.f32.mrb[0].mxu0
    %v777 = vadd.f32 0.0, %v776
    %v778 = vpop.f32.mrb[0].mxu0
    %779 = vmatprep.mubr.bf16.mxu0 0
    %780 = vmatmul.mubr.bf16.gmra.mrb[0].mxu0 %v546
    %v781 = vpop.f32.mrb[0].mxu0
    %v782 = vadd.f32 0.0, %v781
    %v783 = vpop.f32.mrb[0].mxu0
    %v784 = vpop.f32.mrb[0].mxu0
    %v785 = vadd.f32 0.0, %v784
    %v786 = vpop.f32.mrb[0].mxu0
    %787 = vmatprep.mubr.bf16.mxu0 0
    %788 = vmatmul.mubr.bf16.gmra.mrb[0].mxu0 %v549
    %v789 = vpop.f32.mrb[0].mxu0
    %v790 = vadd.f32 0.0, %v789
    %v791 = vpop.f32.mrb[0].mxu0
    %v792 = vpop.f32.mrb[0].mxu0
    %v793 = vadd.f32 0.0, %v792
    %v794 = vpop.f32.mrb[0].mxu0
    %795 = vmatprep.mubr.bf16.mxu0 0
    %796 = vmatmul.mubr.bf16.gmra.mrb[0].mxu0 %v552
    %v797 = vpop.f32.mrb[0].mxu0
    %v798 = vadd.f32 0.0, %v797
    %v799 = vpop.f32.mrb[0].mxu0
    %v800 = vpop.f32.mrb[0].mxu0
    %v801 = vadd.f32 0.0, %v800
    %v802 = vpop.f32.mrb[0].mxu0
    %803 = vmatprep.mubr.bf16.mxu0 0
    %804 = vmatmul.mubr.bf16.gmra.mrb[0].mxu0 %v555
    %v805 = vpop.f32.mrb[0].mxu0
    %v806 = vadd.f32 0.0, %v805
    %v807 = vpop.f32.mrb[0].mxu0
    %v808 = vpop.f32.mrb[0].mxu0
    %v809 = vadd.f32 0.0, %v808
    %v810 = vpop.f32.mrb[0].mxu0
    %811 = vmatprep.mubr.bf16.mxu0 0
    %812 = vmatmul.mubr.bf16.gmra.mrb[0].mxu0 %v558
    %v813 = vpop.f32.mrb[0].mxu0
    %v814 = vadd.f32 0.0, %v813
    %v815 = vpop.f32.mrb[0].mxu0
    %v816 = vpop.f32.mrb[0].mxu0
    %v817 = vadd.f32 0.0, %v816
    %v818 = vpop.f32.mrb[0].mxu0
    %819 = vmatprep.mubr.bf16.mxu0 0
    %820 = vmatmul.mubr.bf16.gmra.mrb[0].mxu0 %v561
    %v821 = vpop.f32.mrb[0].mxu0
    %v822 = vadd.f32 0.0, %v821
    %v823 = vpop.f32.mrb[0].mxu0
    %v824 = vpop.f32.mrb[0].mxu0
    %v825 = vadd.f32 0.0, %v824
    %v826 = vpop.f32.mrb[0].mxu0
    %827 = vmatprep.mubr.bf16.mxu0 0
    %828 = vmatmul.mubr.bf16.gmra.mrb[0].mxu0 %v564
    %v829 = vpop.f32.mrb[0].mxu0
    %v830 = vadd.f32 0.0, %v829
    %v831 = vpop.f32.mrb[0].mxu0
    %v832 = vpop.f32.mrb[0].mxu0
    %v833 = vadd.f32 0.0, %v832
    %v834 = vpop.f32.mrb[0].mxu0
    %835 = vmatprep.mubr.bf16.mxu0 0
    %836 = vmatmul.mubr.bf16.gmra.mrb[0].mxu0 %v567
    %v837 = vpop.f32.mrb[0].mxu0
    %v838 = vadd.f32 0.0, %v837
    %v839 = vpop.f32.mrb[0].mxu0
    %v840 = vpop.f32.mrb[0].mxu0
    %v841 = vadd.f32 0.0, %v840
    %v842 = vpop.f32.mrb[0].mxu0
    %843 = vmatprep.mubr.bf16.mxu0 0
    %844 = vmatmul.mubr.bf16.gmra.mrb[0].mxu0 %v570
    %v845 = vpop.f32.mrb[0].mxu0
    %v846 = vadd.f32 0.0, %v845
    %v847 = vpop.f32.mrb[0].mxu0
    %v848 = vpop.f32.mrb[0].mxu0
    %v849 = vadd.f32 0.0, %v848
    %v850 = vpop.f32.mrb[0].mxu0
    %851 = vmatprep.mubr.bf16.mxu0 0
    %852 = vmatmul.mubr.bf16.gmra.mrb[0].mxu0 %v573
    %v853 = vpop.f32.mrb[0].mxu0
    %v854 = vadd.f32 0.0, %v853
    %v855 = vpop.f32.mrb[0].mxu0
    %v856 = vpop.f32.mrb[0].mxu0
    %v857 = vadd.f32 0.0, %v856
    %v858 = vpop.f32.mrb[0].mxu0
    %859 = vmatprep.mubr.bf16.mxu0 0
    %860 = vmatmul.mubr.bf16.gmra.mrb[0].mxu0 %v576
    %v861 = vpop.f32.mrb[0].mxu0
    %v862 = vadd.f32 0.0, %v861
    %v863 = vpop.f32.mrb[0].mxu0
    %v864 = vpop.f32.mrb[0].mxu0
    %v865 = vadd.f32 0.0, %v864
    %v866 = vpop.f32.mrb[0].mxu0
    %867 = vmatprep.mubr.bf16.mxu0 0
    %868 = vmatmul.mubr.bf16.gmra.mrb[0].mxu0 %v579
    %v869 = vpop.f32.mrb[0].mxu0
    %v870 = vadd.f32 0.0, %v869
    %v871 = vpop.f32.mrb[0].mxu0
    %v872 = vpop.f32.mrb[0].mxu0
    %v873 = vadd.f32 0.0, %v872
    %v874 = vpop.f32.mrb[0].mxu0
    %875 = vmatprep.mubr.bf16.mxu0 0
    %876 = vmatmul.mubr.bf16.gmra.mrb[0].mxu0 %v582
    %v877 = vpop.f32.mrb[0].mxu0
    %v878 = vadd.f32 0.0, %v877
    %v879 = vpop.f32.mrb[0].mxu0
    %v880 = vpop.f32.mrb[0].mxu0
    %v881 = vadd.f32 0.0, %v880
    %v882 = vpop.f32.mrb[0].mxu0
    %883 = vmatprep.mubr.bf16.mxu0 0
    %884 = vmatmul.mubr.bf16.gmra.mrb[0].mxu0 %v585
    %v885 = vpop.f32.mrb[0].mxu0
    %v886 = vadd.f32 0.0, %v885
    %v887 = vpop.f32.mrb[0].mxu0
    %v888 = vpop.f32.mrb[0].mxu0
    %v889 = vadd.f32 0.0, %v888
    %v890 = vpop.f32.mrb[0].mxu0
    %891 = vmatprep.mubr.bf16.mxu0 0
    %892 = vmatmul.mubr.bf16.gmra.mrb[0].mxu0 %v588
    %v893 = vpop.f32.mrb[0].mxu0
    %v894 = vadd.f32 0.0, %v893
    %v895 = vpop.f32.mrb[0].mxu0
    %v896 = vpop.f32.mrb[0].mxu0
    %v897 = vadd.f32 0.0, %v896
    %v898 = vpop.f32.mrb[0].mxu0
    %899 = vmatprep.mubr.bf16.mxu0 0
    %900 = vmatmul.mubr.bf16.gmra.mrb[0].mxu0 %v591
    %v901 = vpop.f32.mrb[0].mxu0
    %v902 = vadd.f32 0.0, %v901
    %v903 = vpop.f32.mrb[0].mxu0
    %v904 = vpop.f32.mrb[0].mxu0
    %v905 = vadd.f32 0.0, %v904
    %v906 = vpop.f32.mrb[0].mxu0
    %907 = vmatprep.mubr.bf16.mxu0 0
    %908 = vmatmul.mubr.bf16.gmra.mrb[0].mxu0 %v594
    %v909 = vpop.f32.mrb[0].mxu0
    %v910 = vadd.f32 0.0, %v909
    %v911 = vpop.f32.mrb[0].mxu0
    %v912 = vpop.f32.mrb[0].mxu0
    %v913 = vadd.f32 0.0, %v912
    %v914 = vpop.f32.mrb[0].mxu0
    %915 = vmatprep.mubr.bf16.mxu0 0
    %916 = vmatmul.mubr.bf16.gmra.mrb[0].mxu0 %v597
    %v917 = vpop.f32.mrb[0].mxu0
    %v918 = vadd.f32 0.0, %v917
    %v919 = vpop.f32.mrb[0].mxu0
    %v920 = vpop.f32.mrb[0].mxu0
    %v921 = vadd.f32 0.0, %v920
    %v922 = vpop.f32.mrb[0].mxu0
    %923 = vmatprep.mubr.bf16.mxu0 0
    %924 = vmatmul.mubr.bf16.gmra.mrb[0].mxu0 %v600
    %v925 = vpop.f32.mrb[0].mxu0
    %v926 = vadd.f32 0.0, %v925
    %v927 = vpop.f32.mrb[0].mxu0
    %v928 = vpop.f32.mrb[0].mxu0
    %v929 = vadd.f32 0.0, %v928
    %v930 = vpop.f32.mrb[0].mxu0
    %931 = vmatprep.mubr.bf16.mxu0 0
    %932 = vmatmul.mubr.bf16.gmra.mrb[0].mxu0 %v603
    %v933 = vpop.f32.mrb[0].mxu0
    %v934 = vadd.f32 0.0, %v933
    %v935 = vpop.f32.mrb[0].mxu0
    %v936 = vpop.f32.mrb[0].mxu0
    %v937 = vadd.f32 0.0, %v936
    %v938 = vpop.f32.mrb[0].mxu0
    %939 = vmatprep.mubr.bf16.mxu0 0
    %940 = vmatmul.mubr.bf16.gmra.mrb[0].mxu0 %v606
    %v941 = vpop.f32.mrb[0].mxu0
    %v942 = vadd.f32 0.0, %v941
    %v943 = vpop.f32.mrb[0].mxu0
    %v944 = vpop.f32.mrb[0].mxu0
    %v945 = vadd.f32 0.0, %v944
    %v946 = vpop.f32.mrb[0].mxu0
    %947 = vmatprep.mubr.bf16.mxu0 0
    %948 = vmatmul.mubr.bf16.gmra.mrb[0].mxu0 %v609
    %v949 = vpop.f32.mrb[0].mxu0
    %v950 = vadd.f32 0.0, %v949
    %v951 = vpop.f32.mrb[0].mxu0
    %v952 = vpop.f32.mrb[0].mxu0
    %v953 = vadd.f32 0.0, %v952
    %v954 = vpop.f32.mrb[0].mxu0
    %955 = vmatprep.mubr.bf16.mxu0 0
    %956 = vmatmul.mubr.bf16.gmra.mrb[0].mxu0 %v612
    %v957 = vpop.f32.mrb[0].mxu0
    %v958 = vadd.f32 0.0, %v957
    %v959 = vpop.f32.mrb[0].mxu0
    %v960 = vpop.f32.mrb[0].mxu0
    %v961 = vadd.f32 0.0, %v960
    %v962 = vpop.f32.mrb[0].mxu0
    %963 = vmatprep.mubr.bf16.mxu0 0
    %964 = vmatmul.mubr.bf16.gmra.mrb[0].mxu0 %v615
    %v965 = vpop.f32.mrb[0].mxu0
    %v966 = vadd.f32 0.0, %v965
    %v967 = vpop.f32.mrb[0].mxu0
    %v968 = vpop.f32.mrb[0].mxu0
    %v969 = vadd.f32 0.0, %v968
    %v970 = vpop.f32.mrb[0].mxu0
    %971 = vmatprep.mubr.bf16.mxu0 0
    %972 = vmatmul.mubr.bf16.gmra.mrb[0].mxu0 %v618
    %v973 = vpop.f32.mrb[0].mxu0
    %v974 = vadd.f32 0.0, %v973
    %v975 = vpop.f32.mrb[0].mxu0
    %v976 = vpop.f32.mrb[0].mxu0
    %v977 = vadd.f32 0.0, %v976
    %v978 = vpop.f32.mrb[0].mxu0
    %979 = vmatprep.mubr.bf16.mxu0 0
    %980 = vmatmul.mubr.bf16.gmra.mrb[0].mxu0 %v621
    %v981 = vpop.f32.mrb[0].mxu0
    %v982 = vadd.f32 0.0, %v981
    %v983 = vpop.f32.mrb[0].mxu0
    %v984 = vpop.f32.mrb[0].mxu0
    %v985 = vadd.f32 0.0, %v984
    %v986 = vpop.f32.mrb[0].mxu0
    %987 = vmatprep.mubr.bf16.mxu0 0
    %988 = vmatmul.mubr.bf16.gmra.mrb[0].mxu0 %v624
    %v989 = vpop.f32.mrb[0].mxu0
    %v990 = vadd.f32 0.0, %v989
    %v991 = vpop.f32.mrb[0].mxu0
    %v992 = vpop.f32.mrb[0].mxu0
    %v993 = vadd.f32 0.0, %v992
    %v994 = vpop.f32.mrb[0].mxu0
    %995 = vmatprep.mubr.bf16.mxu0 0
    %996 = vmatmul.mubr.bf16.gmra.mrb[0].mxu0 %v627
    %v997 = vpop.f32.mrb[0].mxu0
    %v998 = vadd.f32 0.0, %v997
    %v999 = vpop.f32.mrb[0].mxu0
    %v1000 = vpop.f32.mrb[0].mxu0
    %v1001 = vadd.f32 0.0, %v1000
    %v1002 = vpop.f32.mrb[0].mxu0
    %1003 = vmatprep.mubr.bf16.mxu0 0
    %1004 = vmatmul.mubr.bf16.gmra.mrb[0].mxu0 %v630
    %v1005 = vpop.f32.mrb[0].mxu0
    %v1006 = vadd.f32 0.0, %v1005
    %v1007 = vpop.f32.mrb[0].mxu0
    %v1008 = vpop.f32.mrb[0].mxu0
    %v1009 = vadd.f32 0.0, %v1008
    %v1010 = vpop.f32.mrb[0].mxu0
    %1011 = vmatprep.mubr.bf16.mxu0 0
    %1012 = vmatmul.mubr.bf16.gmra.mrb[0].mxu0 %v633
    %v1013 = vpop.f32.mrb[0].mxu0
    %v1014 = vadd.f32 0.0, %v1013
    %v1015 = vpop.f32.mrb[0].mxu0
    %v1016 = vpop.f32.mrb[0].mxu0
    %v1017 = vadd.f32 0.0, %v1016
    %v1018 = vpop.f32.mrb[0].mxu0
    %1019 = vmatprep.mubr.bf16.mxu0 0
    %1020 = vmatmul.mubr.bf16.gmra.mrb[0].mxu0 %v636
    %v1021 = vpop.f32.mrb[0].mxu0
    %v1022 = vadd.f32 0.0, %v1021
    %v1023 = vpop.f32.mrb[0].mxu0
    %v1024 = vpop.f32.mrb[0].mxu0
    %v1025 = vadd.f32 0.0, %v1024
    %v1026 = vpop.f32.mrb[0].mxu0
    %1027 = vmatprep.mubr.bf16.mxu0 0
    %1028 = vmatmul.mubr.bf16.gmra.mrb[0].mxu0 %v639
    %v1029 = vpop.f32.mrb[0].mxu0
    %v1030 = vadd.f32 0.0, %v1029
    %v1031 = vpop.f32.mrb[0].mxu0
    %v1032 = vpop.f32.mrb[0].mxu0
    %v1033 = vadd.f32 0.0, %v1032
    %v1034 = vpop.f32.mrb[0].mxu0
    %1035 = vmatprep.mubr.bf16.mxu0 0
    %1036 = vmatmul.mubr.bf16.gmra.mrb[0].mxu0 %v642
    %v1037 = vpop.f32.mrb[0].mxu0
    %v1038 = vadd.f32 0.0, %v1037
    %v1039 = vpop.f32.mrb[0].mxu0
    %v1040 = vpop.f32.mrb[0].mxu0
    %v1041 = vadd.f32 0.0, %v1040
    %v1042 = vpop.f32.mrb[0].mxu0
    %1043 = vmatprep.mubr.bf16.mxu0 0
    %1044 = vmatmul.mubr.bf16.gmra.mrb[0].mxu0 %v645
    %v1045 = vpop.f32.mrb[0].mxu0
    %v1046 = vadd.f32 0.0, %v1045
    %v1047 = vpop.f32.mrb[0].mxu0
    %v1048 = vpop.f32.mrb[0].mxu0
    %v1049 = vadd.f32 0.0, %v1048
    %v1050 = vpop.f32.mrb[0].mxu0
    %1051 = vmatprep.mubr.bf16.mxu0 0
    %1052 = vmatmul.mubr.bf16.gmra.mrb[0].mxu0 %v648
    %v1053 = vpop.f32.mrb[0].mxu0
    %v1054 = vadd.f32 0.0, %v1053
    %v1055 = vpop.f32.mrb[0].mxu0
    %v1056 = vpop.f32.mrb[0].mxu0
    %v1057 = vadd.f32 0.0, %v1056
    %v1058 = vpop.f32.mrb[0].mxu0
    %1059 = vmatprep.mubr.bf16.mxu0 0
    %1060 = vmatmul.mubr.bf16.gmra.mrb[0].mxu0 %v651
    %v1061 = vpop.f32.mrb[0].mxu0
    %v1062 = vadd.f32 0.0, %v1061
    %v1063 = vpop.f32.mrb[0].mxu0
    %v1064 = vpop.f32.mrb[0].mxu0
    %v1065 = vadd.f32 0.0, %v1064
    %v1066 = vpop.f32.mrb[0].mxu0
    %1067 = vmatprep.mubr.bf16.mxu0 0
    %1068 = vmatmul.mubr.bf16.gmra.mrb[0].mxu0 %v654
    %v1069 = vpop.f32.mrb[0].mxu0
    %v1070 = vadd.f32 0.0, %v1069
    %v1071 = vpop.f32.mrb[0].mxu0
    %v1072 = vpop.f32.mrb[0].mxu0
    %v1073 = vadd.f32 0.0, %v1072
    %v1074 = vpop.f32.mrb[0].mxu0
    %1075 = vmatprep.mubr.bf16.mxu0 0
    %1076 = vmatmul.mubr.bf16.gmra.mrb[0].mxu0 %v657
    %v1077 = vpop.f32.mrb[0].mxu0
    %v1078 = vadd.f32 0.0, %v1077
    %v1079 = vpop.f32.mrb[0].mxu0
    %v1080 = vpop.f32.mrb[0].mxu0
    %v1081 = vadd.f32 0.0, %v1080
    %v1082 = vpop.f32.mrb[0].mxu0
    %1083 = vmatprep.mubr.bf16.mxu0 0
    %1084 = vmatmul.mubr.bf16.gmra.mrb[0].mxu0 %v660
    %v1085 = vpop.f32.mrb[0].mxu0
    %v1086 = vadd.f32 0.0, %v1085
    %v1087 = vpop.f32.mrb[0].mxu0
    %v1088 = vpop.f32.mrb[0].mxu0
    %v1089 = vadd.f32 0.0, %v1088
    %v1090 = vpop.f32.mrb[0].mxu0
    %1091 = vmatprep.mubr.bf16.mxu0 0
    %1092 = vmatmul.mubr.bf16.gmra.mrb[0].mxu0 %v663
    %v1093 = vpop.f32.mrb[0].mxu0
    %v1094 = vadd.f32 0.0, %v1093
    %v1095 = vpop.f32.mrb[0].mxu0
    %v1096 = vpop.f32.mrb[0].mxu0
    %v1097 = vadd.f32 0.0, %v1096
    %v1098 = vpop.f32.mrb[0].mxu0
    %1099 = vmatprep.mubr.bf16.mxu0 0
    %1100 = vmatmul.mubr.bf16.gmra.mrb[0].mxu0 %v666
    %v1101 = vpop.f32.mrb[0].mxu0
    %v1102 = vadd.f32 0.0, %v1101
    %v1103 = vpop.f32.mrb[0].mxu0
    %v1104 = vpop.f32.mrb[0].mxu0
    %v1105 = vadd.f32 0.0, %v1104
    %v1106 = vpop.f32.mrb[0].mxu0
    %1107 = vmatprep.mubr.bf16.mxu0 0
    %1108 = vmatmul.mubr.bf16.gmra.mrb[0].mxu0 %v669
    %v1109 = vpop.f32.mrb[0].mxu0
    %v1110 = vadd.f32 0.0, %v1109
    %v1111 = vpop.f32.mrb[0].mxu0
    %v1112 = vpop.f32.mrb[0].mxu0
    %v1113 = vadd.f32 0.0, %v1112
    %v1114 = vpop.f32.mrb[0].mxu0
    %1115 = vmatprep.mubr.bf16.mxu0 0
    %1116 = vmatmul.mubr.bf16.gmra.mrb[0].mxu0 %v672
    %v1117 = vpop.f32.mrb[0].mxu0
    %v1118 = vadd.f32 0.0, %v1117
    %v1119 = vpop.f32.mrb[0].mxu0
    %v1120 = vpop.f32.mrb[0].mxu0
    %v1121 = vadd.f32 0.0, %v1120
    %v1122 = vpop.f32.mrb[0].mxu0
    %1123 = vmatprep.mubr.bf16.mxu0 0
    %1124 = vmatmul.mubr.bf16.gmra.mrb[0].mxu0 %v675
    %v1125 = vpop.f32.mrb[0].mxu0
    %v1126 = vadd.f32 0.0, %v1125
    %v1127 = vpop.f32.mrb[0].mxu0
    %v1128 = vpop.f32.mrb[0].mxu0
    %v1129 = vadd.f32 0.0, %v1128
    %v1130 = vpop.f32.mrb[0].mxu0
    %1131 = vmatprep.mubr.bf16.mxu0 0
    %1132 = vmatmul.mubr.bf16.gmra.mrb[0].mxu0 %v678
    %v1133 = vpop.f32.mrb[0].mxu0
    %v1134 = vadd.f32 0.0, %v1133
    %v1135 = vpop.f32.mrb[0].mxu0
    %v1136 = vpop.f32.mrb[0].mxu0
    %v1137 = vadd.f32 0.0, %v1136
    %v1138 = vpop.f32.mrb[0].mxu0
    %1139 = vmatprep.mubr.bf16.mxu0 0
    %1140 = vmatmul.mubr.bf16.gmra.mrb[0].mxu0 %v681
    %v1141 = vpop.f32.mrb[0].mxu0
    %v1142 = vadd.f32 0.0, %v1141
    %v1143 = vpop.f32.mrb[0].mxu0
    %v1144 = vpop.f32.mrb[0].mxu0
    %v1145 = vadd.f32 0.0, %v1144
    %v1146 = vpop.f32.mrb[0].mxu0
    %1147 = vmatprep.mubr.bf16.mxu0 0
    %1148 = vmatmul.mubr.bf16.gmra.mrb[0].mxu0 %v684
    %v1149 = vpop.f32.mrb[0].mxu0
    %v1150 = vadd.f32 0.0, %v1149
    %v1151 = vpop.f32.mrb[0].mxu0
    %v1152 = vpop.f32.mrb[0].mxu0
    %v1153 = vadd.f32 0.0, %v1152
    %v1154 = vpop.f32.mrb[0].mxu0
    %1155 = vmatprep.mubr.bf16.mxu0 0
    %1156 = vmatmul.mubr.bf16.gmra.mrb[0].mxu0 %v687
    %v1157 = vpop.f32.mrb[0].mxu0
    %v1158 = vadd.f32 0.0, %v1157
    %v1159 = vpop.f32.mrb[0].mxu0
    %v1160 = vpop.f32.mrb[0].mxu0
    %v1161 = vadd.f32 0.0, %v1160
    %v1162 = vpop.f32.mrb[0].mxu0
    %1163 = vmatprep.mubr.bf16.mxu0 0
    %1164 = vmatmul.mubr.bf16.gmra.mrb[0].mxu0 %v690
    %v1165 = vpop.f32.mrb[0].mxu0
    %v1166 = vadd.f32 0.0, %v1165
    %v1167 = vpop.f32.mrb[0].mxu0
    %v1168 = vpop.f32.mrb[0].mxu0
    %v1169 = vadd.f32 0.0, %v1168
    %v1170 = vpop.f32.mrb[0].mxu0
    %1171 = vmatprep.mubr.bf16.mxu0 0
    %1172 = vmatmul.mubr.bf16.gmra.mrb[0].mxu0 %v693
    %v1173 = vpop.f32.mrb[0].mxu0
    %v1174 = vadd.f32 0.0, %v1173
    %v1175 = vpop.f32.mrb[0].mxu0
    %v1176 = vpop.f32.mrb[0].mxu0
    %v1177 = vadd.f32 0.0, %v1176
    %v1178 = vpop.f32.mrb[0].mxu0
    %1179 = vmatprep.mubr.bf16.mxu0 0
    %1180 = vmatmul.mubr.bf16.gmra.mrb[0].mxu0 %v696
    %v1181 = vpop.f32.mrb[0].mxu0
    %v1182 = vadd.f32 0.0, %v1181
    %v1183 = vpop.f32.mrb[0].mxu0
    %v1184 = vpop.f32.mrb[0].mxu0
    %v1185 = vadd.f32 0.0, %v1184
    %v1186 = vpop.f32.mrb[0].mxu0
    %1187 = vmatprep.mubr.bf16.mxu0 0
    %1188 = vmatmul.mubr.bf16.gmra.mrb[0].mxu0 %v699
    %v1189 = vpop.f32.mrb[0].mxu0
    %v1190 = vadd.f32 0.0, %v1189
    %v1191 = vpop.f32.mrb[0].mxu0
    %v1192 = vpop.f32.mrb[0].mxu0
    %v1193 = vadd.f32 0.0, %v1192
    %v1194 = vpop.f32.mrb[0].mxu0
    %1195 = vmatprep.mubr.bf16.mxu0 0
    %1196 = vmatmul.mubr.bf16.gmra.mrb[0].mxu0 %v702
    %v1197 = vpop.f32.mrb[0].mxu0
    %v1198 = vadd.f32 0.0, %v1197
    %v1199 = vpop.f32.mrb[0].mxu0
    %v1200 = vpop.f32.mrb[0].mxu0
    %v1201 = vadd.f32 0.0, %v1200
    %v1202 = vpop.f32.mrb[0].mxu0
    %1203 = vmatprep.mubr.bf16.mxu0 0
    %1204 = vmatmul.mubr.bf16.gmra.mrb[0].mxu0 %v705
    %v1205 = vpop.f32.mrb[0].mxu0
    %v1206 = vadd.f32 0.0, %v1205
    %v1207 = vpop.f32.mrb[0].mxu0
    %v1208 = vpop.f32.mrb[0].mxu0
    %v1209 = vadd.f32 0.0, %v1208
    %v1210 = vpop.f32.mrb[0].mxu0
    %1211 = vmatprep.mubr.bf16.mxu0 0
    %1212 = vmatmul.mubr.bf16.gmra.mrb[0].mxu0 %v708
    %v1213 = vpop.f32.mrb[0].mxu0
    %v1214 = vadd.f32 0.0, %v1213
    %v1215 = vpop.f32.mrb[0].mxu0
    %v1216 = vpop.f32.mrb[0].mxu0
    %v1217 = vadd.f32 0.0, %v1216
    %v1218 = vpop.f32.mrb[0].mxu0
    %1219 = vmatprep.mubr.bf16.mxu0 0
    %1220 = vmatmul.mubr.bf16.gmra.mrb[0].mxu0 %v711
    %v1221 = vpop.f32.mrb[0].mxu0
    %v1222 = vadd.f32 0.0, %v1221
    %v1223 = vpop.f32.mrb[0].mxu0
    %v1224 = vpop.f32.mrb[0].mxu0
    %v1225 = vadd.f32 0.0, %v1224
    %v1226 = vpop.f32.mrb[0].mxu0
    %1227 = vmatprep.mubr.bf16.mxu0 0
    %1228 = vmatmul.mubr.bf16.gmra.mrb[0].mxu0 %v714
    %v1229 = vpop.f32.mrb[0].mxu0
    %v1230 = vadd.f32 0.0, %v1229
    %v1231 = vpop.f32.mrb[0].mxu0
    %v1232 = vpop.f32.mrb[0].mxu0
    %v1233 = vadd.f32 0.0, %v1232
    %v1234 = vpop.f32.mrb[0].mxu0
    %1235 = vmatprep.mubr.bf16.mxu0 0
    %1236 = vmatmul.mubr.bf16.gmra.mrb[0].mxu0 %v717
    %v1237 = vpop.f32.mrb[0].mxu0
    %v1238 = vadd.f32 0.0, %v1237
    %v1239 = vpop.f32.mrb[0].mxu0
    %v1240 = vpop.f32.mrb[0].mxu0
    %v1241 = vadd.f32 0.0, %v1240
    %v1242 = vpop.f32.mrb[0].mxu0
    %1243 = vmatprep.mubr.bf16.mxu0 0
    %1244 = vmatmul.mubr.bf16.gmra.mrb[0].mxu0 %v720
    %v1245 = vpop.f32.mrb[0].mxu0
    %v1246 = vadd.f32 0.0, %v1245
    %v1247 = vpop.f32.mrb[0].mxu0
    %v1248 = vpop.f32.mrb[0].mxu0
    %v1249 = vadd.f32 0.0, %v1248
    %v1250 = vpop.f32.mrb[0].mxu0
    %1251 = vmatprep.mubr.bf16.mxu0 0
    %1252 = vmatmul.mubr.bf16.gmra.mrb[0].mxu0 %v723
    %v1253 = vpop.f32.mrb[0].mxu0
    %v1254 = vadd.f32 0.0, %v1253
    %v1255 = vpop.f32.mrb[0].mxu0
    %v1256 = vpop.f32.mrb[0].mxu0
    %v1257 = vadd.f32 0.0, %v1256
    %v1258 = vpop.f32.mrb[0].mxu0
    %1259 = vmatprep.mubr.bf16.mxu0 0
    %1260 = vmatmul.mubr.bf16.gmra.mrb[0].mxu0 %v726
    %v1261 = vpop.f32.mrb[0].mxu0
    %v1262 = vadd.f32 0.0, %v1261
    %v1263 = vpop.f32.mrb[0].mxu0
    %v1264 = vpop.f32.mrb[0].mxu0
    %v1265 = vadd.f32 0.0, %v1264
    %v1266 = vpop.f32.mrb[0].mxu0
    %1267 = vmatprep.mubr.bf16.mxu0 0
    %1268 = vmatmul.mubr.bf16.gmra.mrb[0].mxu0 %v729
    %v1269 = vpop.f32.mrb[0].mxu0
    %v1270 = vadd.f32 0.0, %v1269
    %v1271 = vpop.f32.mrb[0].mxu0
    %v1272 = vpop.f32.mrb[0].mxu0
    %v1273 = vadd.f32 0.0, %v1272
    %v1274 = vpop.f32.mrb[0].mxu0
    %1275 = vdwg.mxu0
    %v1276 = vlaneseq
    %v1277 = vshrl.u32 %v1276, 7
    %v1278 = vsub.s32 0, %v1277
    %v1279 = vrot.slane %v47, %v1278
    %v1280 = vlaneseq
    %v1281 = vshrl.u32 %v1280, 7
    %v1282 = vsub.s32 0, %v1281
    %v1283 = vrot.slane %v61, %v1282
    %v1284 = vlaneseq
    %v1285 = vshrl.u32 %v1284, 7
    %v1286 = vsub.s32 0, %v1285
    %v1287 = vrot.slane %v69, %v1286
    %v1288 = vlaneseq
    %v1289 = vshrl.u32 %v1288, 7
    %v1290 = vsub.s32 0, %v1289
    %v1291 = vrot.slane %v71, %v1290
    %v1292 = vlaneseq
    %v1293 = vshrl.u32 %v1292, 7
    %v1294 = vsub.s32 0, %v1293
    %v1295 = vrot.slane %v54, %v1294
    %v1296 = vlaneseq
    %v1297 = vshrl.u32 %v1296, 7
    %v1298 = vsub.s32 0, %v1297
    %v1299 = vrot.slane %v68, %v1298
    %v1300 = vlaneseq
    %v1301 = vshrl.u32 %v1300, 7
    %v1302 = vsub.s32 0, %v1301
    %v1303 = vrot.slane %v70, %v1302
    %v1304 = vlaneseq
    %v1305 = vshrl.u32 %v1304, 7
    %v1306 = vsub.s32 0, %v1305
    %v1307 = vrot.slane %v72, %v1306
    %v1316 = vadd.f32 %v766, %v1279
    %v1317 = vadd.f32 %v769, %v1279
    %v1318 = vadd.f32 %v774, %v1279
    %v1319 = vadd.f32 %v777, %v1279
    %v1320 = vadd.f32 %v782, %v1279
    %v1321 = vadd.f32 %v785, %v1279
    %v1322 = vadd.f32 %v790, %v1279
    %v1323 = vadd.f32 %v793, %v1279
    %v1324 = vadd.f32 %v798, %v1279
    %v1325 = vadd.f32 %v801, %v1279
    %v1326 = vadd.f32 %v806, %v1279
    %v1327 = vadd.f32 %v809, %v1279
    %v1328 = vadd.f32 %v814, %v1279
    %v1329 = vadd.f32 %v817, %v1279
    %v1330 = vadd.f32 %v822, %v1279
    %v1331 = vadd.f32 %v825, %v1279
    %v1332 = vadd.f32 %v830, %v1283
    %v1333 = vadd.f32 %v833, %v1283
    %v1334 = vadd.f32 %v838, %v1283
    %v1335 = vadd.f32 %v841, %v1283
    %v1336 = vadd.f32 %v846, %v1283
    %v1337 = vadd.f32 %v849, %v1283
    %v1338 = vadd.f32 %v854, %v1283
    %v1339 = vadd.f32 %v857, %v1283
    %v1340 = vadd.f32 %v862, %v1283
    %v1341 = vadd.f32 %v865, %v1283
    %v1342 = vadd.f32 %v870, %v1283
    %v1343 = vadd.f32 %v873, %v1283
    %v1344 = vadd.f32 %v878, %v1283
    %v1345 = vadd.f32 %v881, %v1283
    %v1346 = vadd.f32 %v886, %v1283
    %v1347 = vadd.f32 %v889, %v1283
    %v1348 = vadd.f32 %v894, %v1287
    %v1349 = vadd.f32 %v897, %v1287
    %v1350 = vadd.f32 %v902, %v1287
    %v1351 = vadd.f32 %v905, %v1287
    %v1352 = vadd.f32 %v910, %v1287
    %v1353 = vadd.f32 %v913, %v1287
    %v1354 = vadd.f32 %v918, %v1287
    %v1355 = vadd.f32 %v921, %v1287
    %v1356 = vadd.f32 %v926, %v1287
    %v1357 = vadd.f32 %v929, %v1287
    %v1358 = vadd.f32 %v934, %v1287
    %v1359 = vadd.f32 %v937, %v1287
    %v1360 = vadd.f32 %v942, %v1287
    %v1361 = vadd.f32 %v945, %v1287
    %v1362 = vadd.f32 %v950, %v1287
    %v1363 = vadd.f32 %v953, %v1287
    %v1364 = vadd.f32 %v958, %v1291
    %v1365 = vadd.f32 %v961, %v1291
    %v1366 = vadd.f32 %v966, %v1291
    %v1367 = vadd.f32 %v969, %v1291
    %v1368 = vadd.f32 %v974, %v1291
    %v1369 = vadd.f32 %v977, %v1291
    %v1370 = vadd.f32 %v982, %v1291
    %v1371 = vadd.f32 %v985, %v1291
    %v1372 = vadd.f32 %v990, %v1291
    %v1373 = vadd.f32 %v993, %v1291
    %v1374 = vadd.f32 %v998, %v1291
    %v1375 = vadd.f32 %v1001, %v1291
    %v1376 = vadd.f32 %v1006, %v1291
    %v1377 = vadd.f32 %v1009, %v1291
    %v1378 = vadd.f32 %v1014, %v1291
    %v1379 = vadd.f32 %v1017, %v1291
    %v1380 = vadd.f32 %v1022, %v1295
    %v1381 = vadd.f32 %v1025, %v1295
    %v1382 = vadd.f32 %v1030, %v1295
    %v1383 = vadd.f32 %v1033, %v1295
    %v1384 = vadd.f32 %v1038, %v1295
    %v1385 = vadd.f32 %v1041, %v1295
    %v1386 = vadd.f32 %v1046, %v1295
    %v1387 = vadd.f32 %v1049, %v1295
    %v1388 = vadd.f32 %v1054, %v1295
    %v1389 = vadd.f32 %v1057, %v1295
    %v1390 = vadd.f32 %v1062, %v1295
    %v1391 = vadd.f32 %v1065, %v1295
    %v1392 = vadd.f32 %v1070, %v1295
    %v1393 = vadd.f32 %v1073, %v1295
    %v1394 = vadd.f32 %v1078, %v1295
    %v1395 = vadd.f32 %v1081, %v1295
    %v1396 = vadd.f32 %v1086, %v1299
    %v1397 = vadd.f32 %v1089, %v1299
    %v1398 = vadd.f32 %v1094, %v1299
    %v1399 = vadd.f32 %v1097, %v1299
    %v1400 = vadd.f32 %v1102, %v1299
    %v1401 = vadd.f32 %v1105, %v1299
    %v1402 = vadd.f32 %v1110, %v1299
    %v1403 = vadd.f32 %v1113, %v1299
    %v1404 = vadd.f32 %v1118, %v1299
    %v1405 = vadd.f32 %v1121, %v1299
    %v1406 = vadd.f32 %v1126, %v1299
    %v1407 = vadd.f32 %v1129, %v1299
    %v1408 = vadd.f32 %v1134, %v1299
    %v1409 = vadd.f32 %v1137, %v1299
    %v1410 = vadd.f32 %v1142, %v1299
    %v1411 = vadd.f32 %v1145, %v1299
    %v1412 = vadd.f32 %v1150, %v1303
    %v1413 = vadd.f32 %v1153, %v1303
    %v1414 = vadd.f32 %v1158, %v1303
    %v1415 = vadd.f32 %v1161, %v1303
    %v1416 = vadd.f32 %v1166, %v1303
    %v1417 = vadd.f32 %v1169, %v1303
    %v1418 = vadd.f32 %v1174, %v1303
    %v1419 = vadd.f32 %v1177, %v1303
    %v1420 = vadd.f32 %v1182, %v1303
    %v1421 = vadd.f32 %v1185, %v1303
    %v1422 = vadd.f32 %v1190, %v1303
    %v1423 = vadd.f32 %v1193, %v1303
    %v1424 = vadd.f32 %v1198, %v1303
    %v1425 = vadd.f32 %v1201, %v1303
    %v1426 = vadd.f32 %v1206, %v1303
    %v1427 = vadd.f32 %v1209, %v1303
    %v1428 = vadd.f32 %v1214, %v1307
    %v1429 = vadd.f32 %v1217, %v1307
    %v1430 = vadd.f32 %v1222, %v1307
    %v1431 = vadd.f32 %v1225, %v1307
    %v1432 = vadd.f32 %v1230, %v1307
    %v1433 = vadd.f32 %v1233, %v1307
    %v1434 = vadd.f32 %v1238, %v1307
    %v1435 = vadd.f32 %v1241, %v1307
    %v1436 = vadd.f32 %v1246, %v1307
    %v1437 = vadd.f32 %v1249, %v1307
    %v1438 = vadd.f32 %v1254, %v1307
    %v1439 = vadd.f32 %v1257, %v1307
    %v1440 = vadd.f32 %v1262, %v1307
    %v1441 = vadd.f32 %v1265, %v1307
    %v1442 = vadd.f32 %v1270, %v1307
    %v1443 = vadd.f32 %v1273, %v1307
    %v1444 = vtanh.pop %v1316
    %v1445 = vtanh.pop %v1317
    %v1446 = vtanh.pop %v1318
    %v1447 = vtanh.pop %v1319
    %v1448 = vtanh.pop %v1320
    %v1449 = vtanh.pop %v1321
    %v1450 = vtanh.pop %v1322
    %v1451 = vtanh.pop %v1323
    %v1452 = vtanh.pop %v1324
    %v1453 = vtanh.pop %v1325
    %v1454 = vtanh.pop %v1326
    %v1455 = vtanh.pop %v1327
    %v1456 = vtanh.pop %v1328
    %v1457 = vtanh.pop %v1329
    %v1458 = vtanh.pop %v1330
    %v1459 = vtanh.pop %v1331
    %v1460 = vtanh.pop %v1332
    %v1461 = vtanh.pop %v1333
    %v1462 = vtanh.pop %v1334
    %v1463 = vtanh.pop %v1335
    %v1464 = vtanh.pop %v1336
    %v1465 = vtanh.pop %v1337
    %v1466 = vtanh.pop %v1338
    %v1467 = vtanh.pop %v1339
    %v1468 = vtanh.pop %v1340
    %v1469 = vtanh.pop %v1341
    %v1470 = vtanh.pop %v1342
    %v1471 = vtanh.pop %v1343
    %v1472 = vtanh.pop %v1344
    %v1473 = vtanh.pop %v1345
    %v1474 = vtanh.pop %v1346
    %v1475 = vtanh.pop %v1347
    %v1476 = vtanh.pop %v1348
    %v1477 = vtanh.pop %v1349
    %v1478 = vtanh.pop %v1350
    %v1479 = vtanh.pop %v1351
    %v1480 = vtanh.pop %v1352
    %v1481 = vtanh.pop %v1353
    %v1482 = vtanh.pop %v1354
    %v1483 = vtanh.pop %v1355
    %v1484 = vtanh.pop %v1356
    %v1485 = vtanh.pop %v1357
    %v1486 = vtanh.pop %v1358
    %v1487 = vtanh.pop %v1359
    %v1488 = vtanh.pop %v1360
    %v1489 = vtanh.pop %v1361
    %v1490 = vtanh.pop %v1362
    %v1491 = vtanh.pop %v1363
    %v1492 = vtanh.pop %v1364
    %v1493 = vtanh.pop %v1365
    %v1494 = vtanh.pop %v1366
    %v1495 = vtanh.pop %v1367
    %v1496 = vtanh.pop %v1368
    %v1497 = vtanh.pop %v1369
    %v1498 = vtanh.pop %v1370
    %v1499 = vtanh.pop %v1371
    %v1500 = vtanh.pop %v1372
    %v1501 = vtanh.pop %v1373
    %v1502 = vtanh.pop %v1374
    %v1503 = vtanh.pop %v1375
    %v1504 = vtanh.pop %v1376
    %v1505 = vtanh.pop %v1377
    %v1506 = vtanh.pop %v1378
    %v1507 = vtanh.pop %v1379
    %v1508 = vtanh.pop %v1380
    %v1509 = vtanh.pop %v1381
    %v1510 = vtanh.pop %v1382
    %v1511 = vtanh.pop %v1383
    %v1512 = vtanh.pop %v1384
    %v1513 = vtanh.pop %v1385
    %v1514 = vtanh.pop %v1386
    %v1515 = vtanh.pop %v1387
    %v1516 = vtanh.pop %v1388
    %v1517 = vtanh.pop %v1389
    %v1518 = vtanh.pop %v1390
    %v1519 = vtanh.pop %v1391
    %v1520 = vtanh.pop %v1392
    %v1521 = vtanh.pop %v1393
    %v1522 = vtanh.pop %v1394
    %v1523 = vtanh.pop %v1395
    %v1524 = vtanh.pop %v1396
    %v1525 = vtanh.pop %v1397
    %v1526 = vtanh.pop %v1398
    %v1527 = vtanh.pop %v1399
    %v1528 = vtanh.pop %v1400
    %v1529 = vtanh.pop %v1401
    %v1530 = vtanh.pop %v1402
    %v1531 = vtanh.pop %v1403
    %v1532 = vtanh.pop %v1404
    %v1533 = vtanh.pop %v1405
    %v1534 = vtanh.pop %v1406
    %v1535 = vtanh.pop %v1407
    %v1536 = vtanh.pop %v1408
    %v1537 = vtanh.pop %v1409
    %v1538 = vtanh.pop %v1410
    %v1539 = vtanh.pop %v1411
    %v1540 = vtanh.pop %v1412
    %v1541 = vtanh.pop %v1413
    %v1542 = vtanh.pop %v1414
    %v1543 = vtanh.pop %v1415
    %v1544 = vtanh.pop %v1416
    %v1545 = vtanh.pop %v1417
    %v1546 = vtanh.pop %v1418
    %v1547 = vtanh.pop %v1419
    %v1548 = vtanh.pop %v1420
    %v1549 = vtanh.pop %v1421
    %v1550 = vtanh.pop %v1422
    %v1551 = vtanh.pop %v1423
    %v1552 = vtanh.pop %v1424
    %v1553 = vtanh.pop %v1425
    %v1554 = vtanh.pop %v1426
    %v1555 = vtanh.pop %v1427
    %v1556 = vtanh.pop %v1428
    %v1557 = vtanh.pop %v1429
    %v1558 = vtanh.pop %v1430
    %v1559 = vtanh.pop %v1431
    %v1560 = vtanh.pop %v1432
    %v1561 = vtanh.pop %v1433
    %v1562 = vtanh.pop %v1434
    %v1563 = vtanh.pop %v1435
    %v1564 = vtanh.pop %v1436
    %v1565 = vtanh.pop %v1437
    %v1566 = vtanh.pop %v1438
    %v1567 = vtanh.pop %v1439
    %v1568 = vtanh.pop %v1440
    %v1569 = vtanh.pop %v1441
    %v1570 = vtanh.pop %v1442
    %v1571 = vtanh.pop %v1443
    %v1573 = vlaneseq
    %v1574 = vshrl.u32 %v1573, 7
    %v1575 = vsub.s32 0, %v1574
    %v1576 = vrot.slane %v73, %v1575
    %v1578 = vmul.f32 %v1444, %v1576
    %v1579 = vmul.f32 %v1445, %v1576
    %v1580 = vmul.f32 %v1446, %v1576
    %v1581 = vmul.f32 %v1447, %v1576
    %v1582 = vmul.f32 %v1448, %v1576
    %v1583 = vmul.f32 %v1449, %v1576
    %v1584 = vmul.f32 %v1450, %v1576
    %v1585 = vmul.f32 %v1451, %v1576
    %v1586 = vmul.f32 %v1452, %v1576
    %v1587 = vmul.f32 %v1453, %v1576
    %v1588 = vmul.f32 %v1454, %v1576
    %v1589 = vmul.f32 %v1455, %v1576
    %v1590 = vmul.f32 %v1456, %v1576
    %v1591 = vmul.f32 %v1457, %v1576
    %v1592 = vmul.f32 %v1458, %v1576
    %v1593 = vmul.f32 %v1459, %v1576
    %v1594 = vmul.f32 %v1460, %v1576
    %v1595 = vmul.f32 %v1461, %v1576
    %v1596 = vmul.f32 %v1462, %v1576
    %v1597 = vmul.f32 %v1463, %v1576
    %v1598 = vmul.f32 %v1464, %v1576
    %v1599 = vmul.f32 %v1465, %v1576
    %v1600 = vmul.f32 %v1466, %v1576
    %v1601 = vmul.f32 %v1467, %v1576
    %v1602 = vmul.f32 %v1468, %v1576
    %v1603 = vmul.f32 %v1469, %v1576
    %v1604 = vmul.f32 %v1470, %v1576
    %v1605 = vmul.f32 %v1471, %v1576
    %v1606 = vmul.f32 %v1472, %v1576
    %v1607 = vmul.f32 %v1473, %v1576
    %v1608 = vmul.f32 %v1474, %v1576
    %v1609 = vmul.f32 %v1475, %v1576
    %v1610 = vmul.f32 %v1476, %v1576
    %v1611 = vmul.f32 %v1477, %v1576
    %v1612 = vmul.f32 %v1478, %v1576
    %v1613 = vmul.f32 %v1479, %v1576
    %v1614 = vmul.f32 %v1480, %v1576
    %v1615 = vmul.f32 %v1481, %v1576
    %v1616 = vmul.f32 %v1482, %v1576
    %v1617 = vmul.f32 %v1483, %v1576
    %v1618 = vmul.f32 %v1484, %v1576
    %v1619 = vmul.f32 %v1485, %v1576
    %v1620 = vmul.f32 %v1486, %v1576
    %v1621 = vmul.f32 %v1487, %v1576
    %v1622 = vmul.f32 %v1488, %v1576
    %v1623 = vmul.f32 %v1489, %v1576
    %v1624 = vmul.f32 %v1490, %v1576
    %v1625 = vmul.f32 %v1491, %v1576
    %v1626 = vmul.f32 %v1492, %v1576
    %v1627 = vmul.f32 %v1493, %v1576
    %v1628 = vmul.f32 %v1494, %v1576
    %v1629 = vmul.f32 %v1495, %v1576
    %v1630 = vmul.f32 %v1496, %v1576
    %v1631 = vmul.f32 %v1497, %v1576
    %v1632 = vmul.f32 %v1498, %v1576
    %v1633 = vmul.f32 %v1499, %v1576
    %v1634 = vmul.f32 %v1500, %v1576
    %v1635 = vmul.f32 %v1501, %v1576
    %v1636 = vmul.f32 %v1502, %v1576
    %v1637 = vmul.f32 %v1503, %v1576
    %v1638 = vmul.f32 %v1504, %v1576
    %v1639 = vmul.f32 %v1505, %v1576
    %v1640 = vmul.f32 %v1506, %v1576
    %v1641 = vmul.f32 %v1507, %v1576
    %v1642 = vmul.f32 %v1508, %v1576
    %v1643 = vmul.f32 %v1509, %v1576
    %v1644 = vmul.f32 %v1510, %v1576
    %v1645 = vmul.f32 %v1511, %v1576
    %v1646 = vmul.f32 %v1512, %v1576
    %v1647 = vmul.f32 %v1513, %v1576
    %v1648 = vmul.f32 %v1514, %v1576
    %v1649 = vmul.f32 %v1515, %v1576
    %v1650 = vmul.f32 %v1516, %v1576
    %v1651 = vmul.f32 %v1517, %v1576
    %v1652 = vmul.f32 %v1518, %v1576
    %v1653 = vmul.f32 %v1519, %v1576
    %v1654 = vmul.f32 %v1520, %v1576
    %v1655 = vmul.f32 %v1521, %v1576
    %v1656 = vmul.f32 %v1522, %v1576
    %v1657 = vmul.f32 %v1523, %v1576
    %v1658 = vmul.f32 %v1524, %v1576
    %v1659 = vmul.f32 %v1525, %v1576
    %v1660 = vmul.f32 %v1526, %v1576
    %v1661 = vmul.f32 %v1527, %v1576
    %v1662 = vmul.f32 %v1528, %v1576
    %v1663 = vmul.f32 %v1529, %v1576
    %v1664 = vmul.f32 %v1530, %v1576
    %v1665 = vmul.f32 %v1531, %v1576
    %v1666 = vmul.f32 %v1532, %v1576
    %v1667 = vmul.f32 %v1533, %v1576
    %v1668 = vmul.f32 %v1534, %v1576
    %v1669 = vmul.f32 %v1535, %v1576
    %v1670 = vmul.f32 %v1536, %v1576
    %v1671 = vmul.f32 %v1537, %v1576
    %v1672 = vmul.f32 %v1538, %v1576
    %v1673 = vmul.f32 %v1539, %v1576
    %v1674 = vmul.f32 %v1540, %v1576
    %v1675 = vmul.f32 %v1541, %v1576
    %v1676 = vmul.f32 %v1542, %v1576
    %v1677 = vmul.f32 %v1543, %v1576
    %v1678 = vmul.f32 %v1544, %v1576
    %v1679 = vmul.f32 %v1545, %v1576
    %v1680 = vmul.f32 %v1546, %v1576
    %v1681 = vmul.f32 %v1547, %v1576
    %v1682 = vmul.f32 %v1548, %v1576
    %v1683 = vmul.f32 %v1549, %v1576
    %v1684 = vmul.f32 %v1550, %v1576
    %v1685 = vmul.f32 %v1551, %v1576
    %v1686 = vmul.f32 %v1552, %v1576
    %v1687 = vmul.f32 %v1553, %v1576
    %v1688 = vmul.f32 %v1554, %v1576
    %v1689 = vmul.f32 %v1555, %v1576
    %v1690 = vmul.f32 %v1556, %v1576
    %v1691 = vmul.f32 %v1557, %v1576
    %v1692 = vmul.f32 %v1558, %v1576
    %v1693 = vmul.f32 %v1559, %v1576
    %v1694 = vmul.f32 %v1560, %v1576
    %v1695 = vmul.f32 %v1561, %v1576
    %v1696 = vmul.f32 %v1562, %v1576
    %v1697 = vmul.f32 %v1563, %v1576
    %v1698 = vmul.f32 %v1564, %v1576
    %v1699 = vmul.f32 %v1565, %v1576
    %v1700 = vmul.f32 %v1566, %v1576
    %v1701 = vmul.f32 %v1567, %v1576
    %v1702 = vmul.f32 %v1568, %v1576
    %v1703 = vmul.f32 %v1569, %v1576
    %v1704 = vmul.f32 %v1570, %v1576
    %v1705 = vmul.f32 %v1571, %v1576
    %v1706 = vsel %vm538, %v1578, 0.0
    %1707 = vadd.xlane.f32.xlu0 %v1706
    %v1708 = vpop.xlane.xlu0 %1707
    %v1709 = vsel %vm538, %v1579, 0.0
    %1710 = vadd.xlane.f32.xlu0 %v1709
    %v1711 = vpop.xlane.xlu0 %1710
    %v1712 = vsel %vm538, %v1580, 0.0
    %1713 = vadd.xlane.f32.xlu0 %v1712
    %v1714 = vpop.xlane.xlu0 %1713
    %v1715 = vsel %vm538, %v1581, 0.0
    %1716 = vadd.xlane.f32.xlu0 %v1715
    %v1717 = vpop.xlane.xlu0 %1716
    %v1718 = vsel %vm538, %v1582, 0.0
    %1719 = vadd.xlane.f32.xlu0 %v1718
    %v1720 = vpop.xlane.xlu0 %1719
    %v1721 = vsel %vm538, %v1583, 0.0
    %1722 = vadd.xlane.f32.xlu0 %v1721
    %v1723 = vpop.xlane.xlu0 %1722
    %v1724 = vsel %vm538, %v1584, 0.0
    %1725 = vadd.xlane.f32.xlu0 %v1724
    %v1726 = vpop.xlane.xlu0 %1725
    %v1727 = vsel %vm538, %v1585, 0.0
    %1728 = vadd.xlane.f32.xlu0 %v1727
    %v1729 = vpop.xlane.xlu0 %1728
    %v1730 = vsel %vm538, %v1586, 0.0
    %1731 = vadd.xlane.f32.xlu0 %v1730
    %v1732 = vpop.xlane.xlu0 %1731
    %v1733 = vsel %vm538, %v1587, 0.0
    %1734 = vadd.xlane.f32.xlu0 %v1733
    %v1735 = vpop.xlane.xlu0 %1734
    %v1736 = vsel %vm538, %v1588, 0.0
    %1737 = vadd.xlane.f32.xlu0 %v1736
    %v1738 = vpop.xlane.xlu0 %1737
    %v1739 = vsel %vm538, %v1589, 0.0
    %1740 = vadd.xlane.f32.xlu0 %v1739
    %v1741 = vpop.xlane.xlu0 %1740
    %v1742 = vsel %vm538, %v1590, 0.0
    %1743 = vadd.xlane.f32.xlu0 %v1742
    %v1744 = vpop.xlane.xlu0 %1743
    %v1745 = vsel %vm538, %v1591, 0.0
    %1746 = vadd.xlane.f32.xlu0 %v1745
    %v1747 = vpop.xlane.xlu0 %1746
    %v1748 = vsel %vm538, %v1592, 0.0
    %1749 = vadd.xlane.f32.xlu0 %v1748
    %v1750 = vpop.xlane.xlu0 %1749
    %v1751 = vsel %vm538, %v1593, 0.0
    %1752 = vadd.xlane.f32.xlu0 %v1751
    %v1753 = vpop.xlane.xlu0 %1752
    %v1754 = vsel %vm538, %v1594, 0.0
    %1755 = vadd.xlane.f32.xlu0 %v1754
    %v1756 = vpop.xlane.xlu0 %1755
    %v1757 = vsel %vm538, %v1595, 0.0
    %1758 = vadd.xlane.f32.xlu0 %v1757
    %v1759 = vpop.xlane.xlu0 %1758
    %v1760 = vsel %vm538, %v1596, 0.0
    %1761 = vadd.xlane.f32.xlu0 %v1760
    %v1762 = vpop.xlane.xlu0 %1761
    %v1763 = vsel %vm538, %v1597, 0.0
    %1764 = vadd.xlane.f32.xlu0 %v1763
    %v1765 = vpop.xlane.xlu0 %1764
    %v1766 = vsel %vm538, %v1598, 0.0
    %1767 = vadd.xlane.f32.xlu0 %v1766
    %v1768 = vpop.xlane.xlu0 %1767
    %v1769 = vsel %vm538, %v1599, 0.0
    %1770 = vadd.xlane.f32.xlu0 %v1769
    %v1771 = vpop.xlane.xlu0 %1770
    %v1772 = vsel %vm538, %v1600, 0.0
    %1773 = vadd.xlane.f32.xlu0 %v1772
    %v1774 = vpop.xlane.xlu0 %1773
    %v1775 = vsel %vm538, %v1601, 0.0
    %1776 = vadd.xlane.f32.xlu0 %v1775
    %v1777 = vpop.xlane.xlu0 %1776
    %v1778 = vsel %vm538, %v1602, 0.0
    %1779 = vadd.xlane.f32.xlu0 %v1778
    %v1780 = vpop.xlane.xlu0 %1779
    %v1781 = vsel %vm538, %v1603, 0.0
    %1782 = vadd.xlane.f32.xlu0 %v1781
    %v1783 = vpop.xlane.xlu0 %1782
    %v1784 = vsel %vm538, %v1604, 0.0
    %1785 = vadd.xlane.f32.xlu0 %v1784
    %v1786 = vpop.xlane.xlu0 %1785
    %v1787 = vsel %vm538, %v1605, 0.0
    %1788 = vadd.xlane.f32.xlu0 %v1787
    %v1789 = vpop.xlane.xlu0 %1788
    %v1790 = vsel %vm538, %v1606, 0.0
    %1791 = vadd.xlane.f32.xlu0 %v1790
    %v1792 = vpop.xlane.xlu0 %1791
    %v1793 = vsel %vm538, %v1607, 0.0
    %1794 = vadd.xlane.f32.xlu0 %v1793
    %v1795 = vpop.xlane.xlu0 %1794
    %v1796 = vsel %vm538, %v1608, 0.0
    %1797 = vadd.xlane.f32.xlu0 %v1796
    %v1798 = vpop.xlane.xlu0 %1797
    %v1799 = vsel %vm538, %v1609, 0.0
    %1800 = vadd.xlane.f32.xlu0 %v1799
    %v1801 = vpop.xlane.xlu0 %1800
    %v1802 = vsel %vm538, %v1610, 0.0
    %1803 = vadd.xlane.f32.xlu0 %v1802
    %v1804 = vpop.xlane.xlu0 %1803
    %v1805 = vsel %vm538, %v1611, 0.0
    %1806 = vadd.xlane.f32.xlu0 %v1805
    %v1807 = vpop.xlane.xlu0 %1806
    %v1808 = vsel %vm538, %v1612, 0.0
    %1809 = vadd.xlane.f32.xlu0 %v1808
    %v1810 = vpop.xlane.xlu0 %1809
    %v1811 = vsel %vm538, %v1613, 0.0
    %1812 = vadd.xlane.f32.xlu0 %v1811
    %v1813 = vpop.xlane.xlu0 %1812
    %v1814 = vsel %vm538, %v1614, 0.0
    %1815 = vadd.xlane.f32.xlu0 %v1814
    %v1816 = vpop.xlane.xlu0 %1815
    %v1817 = vsel %vm538, %v1615, 0.0
    %1818 = vadd.xlane.f32.xlu0 %v1817
    %v1819 = vpop.xlane.xlu0 %1818
    %v1820 = vsel %vm538, %v1616, 0.0
    %1821 = vadd.xlane.f32.xlu0 %v1820
    %v1822 = vpop.xlane.xlu0 %1821
    %v1823 = vsel %vm538, %v1617, 0.0
    %1824 = vadd.xlane.f32.xlu0 %v1823
    %v1825 = vpop.xlane.xlu0 %1824
    %v1826 = vsel %vm538, %v1618, 0.0
    %1827 = vadd.xlane.f32.xlu0 %v1826
    %v1828 = vpop.xlane.xlu0 %1827
    %v1829 = vsel %vm538, %v1619, 0.0
    %1830 = vadd.xlane.f32.xlu0 %v1829
    %v1831 = vpop.xlane.xlu0 %1830
    %v1832 = vsel %vm538, %v1620, 0.0
    %1833 = vadd.xlane.f32.xlu0 %v1832
    %v1834 = vpop.xlane.xlu0 %1833
    %v1835 = vsel %vm538, %v1621, 0.0
    %1836 = vadd.xlane.f32.xlu0 %v1835
    %v1837 = vpop.xlane.xlu0 %1836
    %v1838 = vsel %vm538, %v1622, 0.0
    %1839 = vadd.xlane.f32.xlu0 %v1838
    %v1840 = vpop.xlane.xlu0 %1839
    %v1841 = vsel %vm538, %v1623, 0.0
    %1842 = vadd.xlane.f32.xlu0 %v1841
    %v1843 = vpop.xlane.xlu0 %1842
    %v1844 = vsel %vm538, %v1624, 0.0
    %1845 = vadd.xlane.f32.xlu0 %v1844
    %v1846 = vpop.xlane.xlu0 %1845
    %v1847 = vsel %vm538, %v1625, 0.0
    %1848 = vadd.xlane.f32.xlu0 %v1847
    %v1849 = vpop.xlane.xlu0 %1848
    %v1850 = vsel %vm538, %v1626, 0.0
    %1851 = vadd.xlane.f32.xlu0 %v1850
    %v1852 = vpop.xlane.xlu0 %1851
    %v1853 = vsel %vm538, %v1627, 0.0
    %1854 = vadd.xlane.f32.xlu0 %v1853
    %v1855 = vpop.xlane.xlu0 %1854
    %v1856 = vsel %vm538, %v1628, 0.0
    %1857 = vadd.xlane.f32.xlu0 %v1856
    %v1858 = vpop.xlane.xlu0 %1857
    %v1859 = vsel %vm538, %v1629, 0.0
    %1860 = vadd.xlane.f32.xlu0 %v1859
    %v1861 = vpop.xlane.xlu0 %1860
    %v1862 = vsel %vm538, %v1630, 0.0
    %1863 = vadd.xlane.f32.xlu0 %v1862
    %v1864 = vpop.xlane.xlu0 %1863
    %v1865 = vsel %vm538, %v1631, 0.0
    %1866 = vadd.xlane.f32.xlu0 %v1865
    %v1867 = vpop.xlane.xlu0 %1866
    %v1868 = vsel %vm538, %v1632, 0.0
    %1869 = vadd.xlane.f32.xlu0 %v1868
    %v1870 = vpop.xlane.xlu0 %1869
    %v1871 = vsel %vm538, %v1633, 0.0
    %1872 = vadd.xlane.f32.xlu0 %v1871
    %v1873 = vpop.xlane.xlu0 %1872
    %v1874 = vsel %vm538, %v1634, 0.0
    %1875 = vadd.xlane.f32.xlu0 %v1874
    %v1876 = vpop.xlane.xlu0 %1875
    %v1877 = vsel %vm538, %v1635, 0.0
    %1878 = vadd.xlane.f32.xlu0 %v1877
    %v1879 = vpop.xlane.xlu0 %1878
    %v1880 = vsel %vm538, %v1636, 0.0
    %1881 = vadd.xlane.f32.xlu0 %v1880
    %v1882 = vpop.xlane.xlu0 %1881
    %v1883 = vsel %vm538, %v1637, 0.0
    %1884 = vadd.xlane.f32.xlu0 %v1883
    %v1885 = vpop.xlane.xlu0 %1884
    %v1886 = vsel %vm538, %v1638, 0.0
    %1887 = vadd.xlane.f32.xlu0 %v1886
    %v1888 = vpop.xlane.xlu0 %1887
    %v1889 = vsel %vm538, %v1639, 0.0
    %1890 = vadd.xlane.f32.xlu0 %v1889
    %v1891 = vpop.xlane.xlu0 %1890
    %v1892 = vsel %vm538, %v1640, 0.0
    %1893 = vadd.xlane.f32.xlu0 %v1892
    %v1894 = vpop.xlane.xlu0 %1893
    %v1895 = vsel %vm538, %v1641, 0.0
    %1896 = vadd.xlane.f32.xlu0 %v1895
    %v1897 = vpop.xlane.xlu0 %1896
    %v1898 = vsel %vm538, %v1642, 0.0
    %1899 = vadd.xlane.f32.xlu0 %v1898
    %v1900 = vpop.xlane.xlu0 %1899
    %v1901 = vsel %vm538, %v1643, 0.0
    %1902 = vadd.xlane.f32.xlu0 %v1901
    %v1903 = vpop.xlane.xlu0 %1902
    %v1904 = vsel %vm538, %v1644, 0.0
    %1905 = vadd.xlane.f32.xlu0 %v1904
    %v1906 = vpop.xlane.xlu0 %1905
    %v1907 = vsel %vm538, %v1645, 0.0
    %1908 = vadd.xlane.f32.xlu0 %v1907
    %v1909 = vpop.xlane.xlu0 %1908
    %v1910 = vsel %vm538, %v1646, 0.0
    %1911 = vadd.xlane.f32.xlu0 %v1910
    %v1912 = vpop.xlane.xlu0 %1911
    %v1913 = vsel %vm538, %v1647, 0.0
    %1914 = vadd.xlane.f32.xlu0 %v1913
    %v1915 = vpop.xlane.xlu0 %1914
    %v1916 = vsel %vm538, %v1648, 0.0
    %1917 = vadd.xlane.f32.xlu0 %v1916
    %v1918 = vpop.xlane.xlu0 %1917
    %v1919 = vsel %vm538, %v1649, 0.0
    %1920 = vadd.xlane.f32.xlu0 %v1919
    %v1921 = vpop.xlane.xlu0 %1920
    %v1922 = vsel %vm538, %v1650, 0.0
    %1923 = vadd.xlane.f32.xlu0 %v1922
    %v1924 = vpop.xlane.xlu0 %1923
    %v1925 = vsel %vm538, %v1651, 0.0
    %1926 = vadd.xlane.f32.xlu0 %v1925
    %v1927 = vpop.xlane.xlu0 %1926
    %v1928 = vsel %vm538, %v1652, 0.0
    %1929 = vadd.xlane.f32.xlu0 %v1928
    %v1930 = vpop.xlane.xlu0 %1929
    %v1931 = vsel %vm538, %v1653, 0.0
    %1932 = vadd.xlane.f32.xlu0 %v1931
    %v1933 = vpop.xlane.xlu0 %1932
    %v1934 = vsel %vm538, %v1654, 0.0
    %1935 = vadd.xlane.f32.xlu0 %v1934
    %v1936 = vpop.xlane.xlu0 %1935
    %v1937 = vsel %vm538, %v1655, 0.0
    %1938 = vadd.xlane.f32.xlu0 %v1937
    %v1939 = vpop.xlane.xlu0 %1938
    %v1940 = vsel %vm538, %v1656, 0.0
    %1941 = vadd.xlane.f32.xlu0 %v1940
    %v1942 = vpop.xlane.xlu0 %1941
    %v1943 = vsel %vm538, %v1657, 0.0
    %1944 = vadd.xlane.f32.xlu0 %v1943
    %v1945 = vpop.xlane.xlu0 %1944
    %v1946 = vsel %vm538, %v1658, 0.0
    %1947 = vadd.xlane.f32.xlu0 %v1946
    %v1948 = vpop.xlane.xlu0 %1947
    %v1949 = vsel %vm538, %v1659, 0.0
    %1950 = vadd.xlane.f32.xlu0 %v1949
    %v1951 = vpop.xlane.xlu0 %1950
    %v1952 = vsel %vm538, %v1660, 0.0
    %1953 = vadd.xlane.f32.xlu0 %v1952
    %v1954 = vpop.xlane.xlu0 %1953
    %v1955 = vsel %vm538, %v1661, 0.0
    %1956 = vadd.xlane.f32.xlu0 %v1955
    %v1957 = vpop.xlane.xlu0 %1956
    %v1958 = vsel %vm538, %v1662, 0.0
    %1959 = vadd.xlane.f32.xlu0 %v1958
    %v1960 = vpop.xlane.xlu0 %1959
    %v1961 = vsel %vm538, %v1663, 0.0
    %1962 = vadd.xlane.f32.xlu0 %v1961
    %v1963 = vpop.xlane.xlu0 %1962
    %v1964 = vsel %vm538, %v1664, 0.0
    %1965 = vadd.xlane.f32.xlu0 %v1964
    %v1966 = vpop.xlane.xlu0 %1965
    %v1967 = vsel %vm538, %v1665, 0.0
    %1968 = vadd.xlane.f32.xlu0 %v1967
    %v1969 = vpop.xlane.xlu0 %1968
    %v1970 = vsel %vm538, %v1666, 0.0
    %1971 = vadd.xlane.f32.xlu0 %v1970
    %v1972 = vpop.xlane.xlu0 %1971
    %v1973 = vsel %vm538, %v1667, 0.0
    %1974 = vadd.xlane.f32.xlu0 %v1973
    %v1975 = vpop.xlane.xlu0 %1974
    %v1976 = vsel %vm538, %v1668, 0.0
    %1977 = vadd.xlane.f32.xlu0 %v1976
    %v1978 = vpop.xlane.xlu0 %1977
    %v1979 = vsel %vm538, %v1669, 0.0
    %1980 = vadd.xlane.f32.xlu0 %v1979
    %v1981 = vpop.xlane.xlu0 %1980
    %v1982 = vsel %vm538, %v1670, 0.0
    %1983 = vadd.xlane.f32.xlu0 %v1982
    %v1984 = vpop.xlane.xlu0 %1983
    %v1985 = vsel %vm538, %v1671, 0.0
    %1986 = vadd.xlane.f32.xlu0 %v1985
    %v1987 = vpop.xlane.xlu0 %1986
    %v1988 = vsel %vm538, %v1672, 0.0
    %1989 = vadd.xlane.f32.xlu0 %v1988
    %v1990 = vpop.xlane.xlu0 %1989
    %v1991 = vsel %vm538, %v1673, 0.0
    %1992 = vadd.xlane.f32.xlu0 %v1991
    %v1993 = vpop.xlane.xlu0 %1992
    %v1994 = vsel %vm538, %v1674, 0.0
    %1995 = vadd.xlane.f32.xlu0 %v1994
    %v1996 = vpop.xlane.xlu0 %1995
    %v1997 = vsel %vm538, %v1675, 0.0
    %1998 = vadd.xlane.f32.xlu0 %v1997
    %v1999 = vpop.xlane.xlu0 %1998
    %v2000 = vsel %vm538, %v1676, 0.0
    %2001 = vadd.xlane.f32.xlu0 %v2000
    %v2002 = vpop.xlane.xlu0 %2001
    %v2003 = vsel %vm538, %v1677, 0.0
    %2004 = vadd.xlane.f32.xlu0 %v2003
    %v2005 = vpop.xlane.xlu0 %2004
    %v2006 = vsel %vm538, %v1678, 0.0
    %2007 = vadd.xlane.f32.xlu0 %v2006
    %v2008 = vpop.xlane.xlu0 %2007
    %v2009 = vsel %vm538, %v1679, 0.0
    %2010 = vadd.xlane.f32.xlu0 %v2009
    %v2011 = vpop.xlane.xlu0 %2010
    %v2012 = vsel %vm538, %v1680, 0.0
    %2013 = vadd.xlane.f32.xlu0 %v2012
    %v2014 = vpop.xlane.xlu0 %2013
    %v2015 = vsel %vm538, %v1681, 0.0
    %2016 = vadd.xlane.f32.xlu0 %v2015
    %v2017 = vpop.xlane.xlu0 %2016
    %v2018 = vsel %vm538, %v1682, 0.0
    %2019 = vadd.xlane.f32.xlu0 %v2018
    %v2020 = vpop.xlane.xlu0 %2019
    %v2021 = vsel %vm538, %v1683, 0.0
    %2022 = vadd.xlane.f32.xlu0 %v2021
    %v2023 = vpop.xlane.xlu0 %2022
    %v2024 = vsel %vm538, %v1684, 0.0
    %2025 = vadd.xlane.f32.xlu0 %v2024
    %v2026 = vpop.xlane.xlu0 %2025
    %v2027 = vsel %vm538, %v1685, 0.0
    %2028 = vadd.xlane.f32.xlu0 %v2027
    %v2029 = vpop.xlane.xlu0 %2028
    %v2030 = vsel %vm538, %v1686, 0.0
    %2031 = vadd.xlane.f32.xlu0 %v2030
    %v2032 = vpop.xlane.xlu0 %2031
    %v2033 = vsel %vm538, %v1687, 0.0
    %2034 = vadd.xlane.f32.xlu0 %v2033
    %v2035 = vpop.xlane.xlu0 %2034
    %v2036 = vsel %vm538, %v1688, 0.0
    %2037 = vadd.xlane.f32.xlu0 %v2036
    %v2038 = vpop.xlane.xlu0 %2037
    %v2039 = vsel %vm538, %v1689, 0.0
    %2040 = vadd.xlane.f32.xlu0 %v2039
    %v2041 = vpop.xlane.xlu0 %2040
    %v2042 = vsel %vm538, %v1690, 0.0
    %2043 = vadd.xlane.f32.xlu0 %v2042
    %v2044 = vpop.xlane.xlu0 %2043
    %v2045 = vsel %vm538, %v1691, 0.0
    %2046 = vadd.xlane.f32.xlu0 %v2045
    %v2047 = vpop.xlane.xlu0 %2046
    %v2048 = vsel %vm538, %v1692, 0.0
    %2049 = vadd.xlane.f32.xlu0 %v2048
    %v2050 = vpop.xlane.xlu0 %2049
    %v2051 = vsel %vm538, %v1693, 0.0
    %2052 = vadd.xlane.f32.xlu0 %v2051
    %v2053 = vpop.xlane.xlu0 %2052
    %v2054 = vsel %vm538, %v1694, 0.0
    %2055 = vadd.xlane.f32.xlu0 %v2054
    %v2056 = vpop.xlane.xlu0 %2055
    %v2057 = vsel %vm538, %v1695, 0.0
    %2058 = vadd.xlane.f32.xlu0 %v2057
    %v2059 = vpop.xlane.xlu0 %2058
    %v2060 = vsel %vm538, %v1696, 0.0
    %2061 = vadd.xlane.f32.xlu0 %v2060
    %v2062 = vpop.xlane.xlu0 %2061
    %v2063 = vsel %vm538, %v1697, 0.0
    %2064 = vadd.xlane.f32.xlu0 %v2063
    %v2065 = vpop.xlane.xlu0 %2064
    %v2066 = vsel %vm538, %v1698, 0.0
    %2067 = vadd.xlane.f32.xlu0 %v2066
    %v2068 = vpop.xlane.xlu0 %2067
    %v2069 = vsel %vm538, %v1699, 0.0
    %2070 = vadd.xlane.f32.xlu0 %v2069
    %v2071 = vpop.xlane.xlu0 %2070
    %v2072 = vsel %vm538, %v1700, 0.0
    %2073 = vadd.xlane.f32.xlu0 %v2072
    %v2074 = vpop.xlane.xlu0 %2073
    %v2075 = vsel %vm538, %v1701, 0.0
    %2076 = vadd.xlane.f32.xlu0 %v2075
    %v2077 = vpop.xlane.xlu0 %2076
    %v2078 = vsel %vm538, %v1702, 0.0
    %2079 = vadd.xlane.f32.xlu0 %v2078
    %v2080 = vpop.xlane.xlu0 %2079
    %v2081 = vsel %vm538, %v1703, 0.0
    %2082 = vadd.xlane.f32.xlu0 %v2081
    %v2083 = vpop.xlane.xlu0 %2082
    %v2084 = vsel %vm538, %v1704, 0.0
    %2085 = vadd.xlane.f32.xlu0 %v2084
    %v2086 = vpop.xlane.xlu0 %2085
    %v2087 = vsel %vm538, %v1705, 0.0
    %2088 = vadd.xlane.f32.xlu0 %v2087
    %v2089 = vpop.xlane.xlu0 %2088
    %v2090 = vld [vmem:[%s2] sm:$0xff]
    %vm2091 = vcmp.lt.f32.partialorder %v2090, -0.5
    %v2220 = vlaneseq
    %v2221 = vand.u32 %v2220, 127
    %v2222 = vlaneseq
    %v2223 = vshrl.u32 %v2222, 7
    %v2224 = vsub.s32 %v2221, %v2223
    %v2225 = vrot.slane %v1708, %v2224
    %v2226 = vadd.s32 %v2221, 4294967288
    %v2227 = vlaneseq
    %v2228 = vshrl.u32 %v2227, 7
    %v2229 = vsub.s32 %v2226, %v2228
    %v2230 = vrot.slane %v1711, %v2229
    %vm2231 = vcmask 130112
    %v2232 = vsel %vm2231, %v2230, %v2225
    %v2233 = vadd.s32 %v2221, 4294967280
    %v2234 = vlaneseq
    %v2235 = vshrl.u32 %v2234, 7
    %v2236 = vsub.s32 %v2233, %v2235
    %v2237 = vrot.slane %v1714, %v2236
    %vm2238 = vcmask 195712
    %v2239 = vsel %vm2238, %v2237, %v2232
    %v2240 = vadd.s32 %v2221, 4294967272
    %v2241 = vlaneseq
    %v2242 = vshrl.u32 %v2241, 7
    %v2243 = vsub.s32 %v2240, %v2242
    %v2244 = vrot.slane %v1717, %v2243
    %vm2245 = vcmask 261312
    %v2246 = vsel %vm2245, %v2244, %v2239
    %v2247 = vadd.s32 %v2221, 4294967264
    %v2248 = vlaneseq
    %v2249 = vshrl.u32 %v2248, 7
    %v2250 = vsub.s32 %v2247, %v2249
    %v2251 = vrot.slane %v1720, %v2250
    %vm2252 = vcmask 326912
    %v2253 = vsel %vm2252, %v2251, %v2246
    %v2254 = vadd.s32 %v2221, 4294967256
    %v2255 = vlaneseq
    %v2256 = vshrl.u32 %v2255, 7
    %v2257 = vsub.s32 %v2254, %v2256
    %v2258 = vrot.slane %v1723, %v2257
    %vm2259 = vcmask 392512
    %v2260 = vsel %vm2259, %v2258, %v2253
    %v2261 = vadd.s32 %v2221, 4294967248
    %v2262 = vlaneseq
    %v2263 = vshrl.u32 %v2262, 7
    %v2264 = vsub.s32 %v2261, %v2263
    %v2265 = vrot.slane %v1726, %v2264
    %vm2266 = vcmask 458112
    %v2267 = vsel %vm2266, %v2265, %v2260
    %v2268 = vadd.s32 %v2221, 4294967240
    %v2269 = vlaneseq
    %v2270 = vshrl.u32 %v2269, 7
    %v2271 = vsub.s32 %v2268, %v2270
    %v2272 = vrot.slane %v1729, %v2271
    %vm2273 = vcmask 523712
    %v2274 = vsel %vm2273, %v2272, %v2267
    %v2275 = vadd.s32 %v2221, 4294967232
    %v2276 = vlaneseq
    %v2277 = vshrl.u32 %v2276, 7
    %v2278 = vsub.s32 %v2275, %v2277
    %v2279 = vrot.slane %v1732, %v2278
    %vm2280 = vcmask 589312
    %v2281 = vsel %vm2280, %v2279, %v2274
    %v2282 = vadd.s32 %v2221, 4294967224
    %v2283 = vlaneseq
    %v2284 = vshrl.u32 %v2283, 7
    %v2285 = vsub.s32 %v2282, %v2284
    %v2286 = vrot.slane %v1735, %v2285
    %vm2287 = vcmask 654912
    %v2288 = vsel %vm2287, %v2286, %v2281
    %v2289 = vadd.s32 %v2221, 4294967216
    %v2290 = vlaneseq
    %v2291 = vshrl.u32 %v2290, 7
    %v2292 = vsub.s32 %v2289, %v2291
    %v2293 = vrot.slane %v1738, %v2292
    %vm2294 = vcmask 720512
    %v2295 = vsel %vm2294, %v2293, %v2288
    %v2296 = vadd.s32 %v2221, 4294967208
    %v2297 = vlaneseq
    %v2298 = vshrl.u32 %v2297, 7
    %v2299 = vsub.s32 %v2296, %v2298
    %v2300 = vrot.slane %v1741, %v2299
    %vm2301 = vcmask 786112
    %v2302 = vsel %vm2301, %v2300, %v2295
    %v2303 = vadd.s32 %v2221, 4294967200
    %v2304 = vlaneseq
    %v2305 = vshrl.u32 %v2304, 7
    %v2306 = vsub.s32 %v2303, %v2305
    %v2307 = vrot.slane %v1744, %v2306
    %vm2308 = vcmask 851712
    %v2309 = vsel %vm2308, %v2307, %v2302
    %v2310 = vadd.s32 %v2221, 4294967192
    %v2311 = vlaneseq
    %v2312 = vshrl.u32 %v2311, 7
    %v2313 = vsub.s32 %v2310, %v2312
    %v2314 = vrot.slane %v1747, %v2313
    %vm2315 = vcmask 917312
    %v2316 = vsel %vm2315, %v2314, %v2309
    %v2317 = vadd.s32 %v2221, 4294967184
    %v2318 = vlaneseq
    %v2319 = vshrl.u32 %v2318, 7
    %v2320 = vsub.s32 %v2317, %v2319
    %v2321 = vrot.slane %v1750, %v2320
    %vm2322 = vcmask 982912
    %v2323 = vsel %vm2322, %v2321, %v2316
    %v2324 = vadd.s32 %v2221, 4294967176
    %v2325 = vlaneseq
    %v2326 = vshrl.u32 %v2325, 7
    %v2327 = vsub.s32 %v2324, %v2326
    %v2328 = vrot.slane %v1753, %v2327
    %vm2329 = vcmask 1048512
    %v2330 = vsel %vm2329, %v2328, %v2323
    %v2331 = vlaneseq
    %v2332 = vshrl.u32 %v2331, 7
    %v2333 = vsub.s32 %v2221, %v2332
    %v2334 = vrot.slane %v1756, %v2333
    %v2335 = vlaneseq
    %v2336 = vshrl.u32 %v2335, 7
    %v2337 = vsub.s32 %v2226, %v2336
    %v2338 = vrot.slane %v1759, %v2337
    %v2339 = vsel %vm2231, %v2338, %v2334
    %v2340 = vlaneseq
    %v2341 = vshrl.u32 %v2340, 7
    %v2342 = vsub.s32 %v2233, %v2341
    %v2343 = vrot.slane %v1762, %v2342
    %v2344 = vsel %vm2238, %v2343, %v2339
    %v2345 = vlaneseq
    %v2346 = vshrl.u32 %v2345, 7
    %v2347 = vsub.s32 %v2240, %v2346
    %v2348 = vrot.slane %v1765, %v2347
    %v2349 = vsel %vm2245, %v2348, %v2344
    %v2350 = vlaneseq
    %v2351 = vshrl.u32 %v2350, 7
    %v2352 = vsub.s32 %v2247, %v2351
    %v2353 = vrot.slane %v1768, %v2352
    %v2354 = vsel %vm2252, %v2353, %v2349
    %v2355 = vlaneseq
    %v2356 = vshrl.u32 %v2355, 7
    %v2357 = vsub.s32 %v2254, %v2356
    %v2358 = vrot.slane %v1771, %v2357
    %v2359 = vsel %vm2259, %v2358, %v2354
    %v2360 = vlaneseq
    %v2361 = vshrl.u32 %v2360, 7
    %v2362 = vsub.s32 %v2261, %v2361
    %v2363 = vrot.slane %v1774, %v2362
    %v2364 = vsel %vm2266, %v2363, %v2359
    %v2365 = vlaneseq
    %v2366 = vshrl.u32 %v2365, 7
    %v2367 = vsub.s32 %v2268, %v2366
    %v2368 = vrot.slane %v1777, %v2367
    %v2369 = vsel %vm2273, %v2368, %v2364
    %v2370 = vlaneseq
    %v2371 = vshrl.u32 %v2370, 7
    %v2372 = vsub.s32 %v2275, %v2371
    %v2373 = vrot.slane %v1780, %v2372
    %v2374 = vsel %vm2280, %v2373, %v2369
    %v2375 = vlaneseq
    %v2376 = vshrl.u32 %v2375, 7
    %v2377 = vsub.s32 %v2282, %v2376
    %v2378 = vrot.slane %v1783, %v2377
    %v2379 = vsel %vm2287, %v2378, %v2374
    %v2380 = vlaneseq
    %v2381 = vshrl.u32 %v2380, 7
    %v2382 = vsub.s32 %v2289, %v2381
    %v2383 = vrot.slane %v1786, %v2382
    %v2384 = vsel %vm2294, %v2383, %v2379
    %v2385 = vlaneseq
    %v2386 = vshrl.u32 %v2385, 7
    %v2387 = vsub.s32 %v2296, %v2386
    %v2388 = vrot.slane %v1789, %v2387
    %v2389 = vsel %vm2301, %v2388, %v2384
    %v2390 = vlaneseq
    %v2391 = vshrl.u32 %v2390, 7
    %v2392 = vsub.s32 %v2303, %v2391
    %v2393 = vrot.slane %v1792, %v2392
    %v2394 = vsel %vm2308, %v2393, %v2389
    %v2395 = vlaneseq
    %v2396 = vshrl.u32 %v2395, 7
    %v2397 = vsub.s32 %v2310, %v2396
    %v2398 = vrot.slane %v1795, %v2397
    %v2399 = vsel %vm2315, %v2398, %v2394
    %v2400 = vlaneseq
    %v2401 = vshrl.u32 %v2400, 7
    %v2402 = vsub.s32 %v2317, %v2401
    %v2403 = vrot.slane %v1798, %v2402
    %v2404 = vsel %vm2322, %v2403, %v2399
    %v2405 = vlaneseq
    %v2406 = vshrl.u32 %v2405, 7
    %v2407 = vsub.s32 %v2324, %v2406
    %v2408 = vrot.slane %v1801, %v2407
    %v2409 = vsel %vm2329, %v2408, %v2404
    %v2410 = vlaneseq
    %v2411 = vshrl.u32 %v2410, 7
    %v2412 = vsub.s32 %v2221, %v2411
    %v2413 = vrot.slane %v1804, %v2412
    %v2414 = vlaneseq
    %v2415 = vshrl.u32 %v2414, 7
    %v2416 = vsub.s32 %v2226, %v2415
    %v2417 = vrot.slane %v1807, %v2416
    %v2418 = vsel %vm2231, %v2417, %v2413
    %v2419 = vlaneseq
    %v2420 = vshrl.u32 %v2419, 7
    %v2421 = vsub.s32 %v2233, %v2420
    %v2422 = vrot.slane %v1810, %v2421
    %v2423 = vsel %vm2238, %v2422, %v2418
    %v2424 = vlaneseq
    %v2425 = vshrl.u32 %v2424, 7
    %v2426 = vsub.s32 %v2240, %v2425
    %v2427 = vrot.slane %v1813, %v2426
    %v2428 = vsel %vm2245, %v2427, %v2423
    %v2429 = vlaneseq
    %v2430 = vshrl.u32 %v2429, 7
    %v2431 = vsub.s32 %v2247, %v2430
    %v2432 = vrot.slane %v1816, %v2431
    %v2433 = vsel %vm2252, %v2432, %v2428
    %v2434 = vlaneseq
    %v2435 = vshrl.u32 %v2434, 7
    %v2436 = vsub.s32 %v2254, %v2435
    %v2437 = vrot.slane %v1819, %v2436
    %v2438 = vsel %vm2259, %v2437, %v2433
    %v2439 = vlaneseq
    %v2440 = vshrl.u32 %v2439, 7
    %v2441 = vsub.s32 %v2261, %v2440
    %v2442 = vrot.slane %v1822, %v2441
    %v2443 = vsel %vm2266, %v2442, %v2438
    %v2444 = vlaneseq
    %v2445 = vshrl.u32 %v2444, 7
    %v2446 = vsub.s32 %v2268, %v2445
    %v2447 = vrot.slane %v1825, %v2446
    %v2448 = vsel %vm2273, %v2447, %v2443
    %v2449 = vlaneseq
    %v2450 = vshrl.u32 %v2449, 7
    %v2451 = vsub.s32 %v2275, %v2450
    %v2452 = vrot.slane %v1828, %v2451
    %v2453 = vsel %vm2280, %v2452, %v2448
    %v2454 = vlaneseq
    %v2455 = vshrl.u32 %v2454, 7
    %v2456 = vsub.s32 %v2282, %v2455
    %v2457 = vrot.slane %v1831, %v2456
    %v2458 = vsel %vm2287, %v2457, %v2453
    %v2459 = vlaneseq
    %v2460 = vshrl.u32 %v2459, 7
    %v2461 = vsub.s32 %v2289, %v2460
    %v2462 = vrot.slane %v1834, %v2461
    %v2463 = vsel %vm2294, %v2462, %v2458
    %v2464 = vlaneseq
    %v2465 = vshrl.u32 %v2464, 7
    %v2466 = vsub.s32 %v2296, %v2465
    %v2467 = vrot.slane %v1837, %v2466
    %v2468 = vsel %vm2301, %v2467, %v2463
    %v2469 = vlaneseq
    %v2470 = vshrl.u32 %v2469, 7
    %v2471 = vsub.s32 %v2303, %v2470
    %v2472 = vrot.slane %v1840, %v2471
    %v2473 = vsel %vm2308, %v2472, %v2468
    %v2474 = vlaneseq
    %v2475 = vshrl.u32 %v2474, 7
    %v2476 = vsub.s32 %v2310, %v2475
    %v2477 = vrot.slane %v1843, %v2476
    %v2478 = vsel %vm2315, %v2477, %v2473
    %v2479 = vlaneseq
    %v2480 = vshrl.u32 %v2479, 7
    %v2481 = vsub.s32 %v2317, %v2480
    %v2482 = vrot.slane %v1846, %v2481
    %v2483 = vsel %vm2322, %v2482, %v2478
    %v2484 = vlaneseq
    %v2485 = vshrl.u32 %v2484, 7
    %v2486 = vsub.s32 %v2324, %v2485
    %v2487 = vrot.slane %v1849, %v2486
    %v2488 = vsel %vm2329, %v2487, %v2483
    %v2489 = vlaneseq
    %v2490 = vshrl.u32 %v2489, 7
    %v2491 = vsub.s32 %v2221, %v2490
    %v2492 = vrot.slane %v1852, %v2491
    %v2493 = vlaneseq
    %v2494 = vshrl.u32 %v2493, 7
    %v2495 = vsub.s32 %v2226, %v2494
    %v2496 = vrot.slane %v1855, %v2495
    %v2497 = vsel %vm2231, %v2496, %v2492
    %v2498 = vlaneseq
    %v2499 = vshrl.u32 %v2498, 7
    %v2500 = vsub.s32 %v2233, %v2499
    %v2501 = vrot.slane %v1858, %v2500
    %v2502 = vsel %vm2238, %v2501, %v2497
    %v2503 = vlaneseq
    %v2504 = vshrl.u32 %v2503, 7
    %v2505 = vsub.s32 %v2240, %v2504
    %v2506 = vrot.slane %v1861, %v2505
    %v2507 = vsel %vm2245, %v2506, %v2502
    %v2508 = vlaneseq
    %v2509 = vshrl.u32 %v2508, 7
    %v2510 = vsub.s32 %v2247, %v2509
    %v2511 = vrot.slane %v1864, %v2510
    %v2512 = vsel %vm2252, %v2511, %v2507
    %v2513 = vlaneseq
    %v2514 = vshrl.u32 %v2513, 7
    %v2515 = vsub.s32 %v2254, %v2514
    %v2516 = vrot.slane %v1867, %v2515
    %v2517 = vsel %vm2259, %v2516, %v2512
    %v2518 = vlaneseq
    %v2519 = vshrl.u32 %v2518, 7
    %v2520 = vsub.s32 %v2261, %v2519
    %v2521 = vrot.slane %v1870, %v2520
    %v2522 = vsel %vm2266, %v2521, %v2517
    %v2523 = vlaneseq
    %v2524 = vshrl.u32 %v2523, 7
    %v2525 = vsub.s32 %v2268, %v2524
    %v2526 = vrot.slane %v1873, %v2525
    %v2527 = vsel %vm2273, %v2526, %v2522
    %v2528 = vlaneseq
    %v2529 = vshrl.u32 %v2528, 7
    %v2530 = vsub.s32 %v2275, %v2529
    %v2531 = vrot.slane %v1876, %v2530
    %v2532 = vsel %vm2280, %v2531, %v2527
    %v2533 = vlaneseq
    %v2534 = vshrl.u32 %v2533, 7
    %v2535 = vsub.s32 %v2282, %v2534
    %v2536 = vrot.slane %v1879, %v2535
    %v2537 = vsel %vm2287, %v2536, %v2532
    %v2538 = vlaneseq
    %v2539 = vshrl.u32 %v2538, 7
    %v2540 = vsub.s32 %v2289, %v2539
    %v2541 = vrot.slane %v1882, %v2540
    %v2542 = vsel %vm2294, %v2541, %v2537
    %v2543 = vlaneseq
    %v2544 = vshrl.u32 %v2543, 7
    %v2545 = vsub.s32 %v2296, %v2544
    %v2546 = vrot.slane %v1885, %v2545
    %v2547 = vsel %vm2301, %v2546, %v2542
    %v2548 = vlaneseq
    %v2549 = vshrl.u32 %v2548, 7
    %v2550 = vsub.s32 %v2303, %v2549
    %v2551 = vrot.slane %v1888, %v2550
    %v2552 = vsel %vm2308, %v2551, %v2547
    %v2553 = vlaneseq
    %v2554 = vshrl.u32 %v2553, 7
    %v2555 = vsub.s32 %v2310, %v2554
    %v2556 = vrot.slane %v1891, %v2555
    %v2557 = vsel %vm2315, %v2556, %v2552
    %v2558 = vlaneseq
    %v2559 = vshrl.u32 %v2558, 7
    %v2560 = vsub.s32 %v2317, %v2559
    %v2561 = vrot.slane %v1894, %v2560
    %v2562 = vsel %vm2322, %v2561, %v2557
    %v2563 = vlaneseq
    %v2564 = vshrl.u32 %v2563, 7
    %v2565 = vsub.s32 %v2324, %v2564
    %v2566 = vrot.slane %v1897, %v2565
    %v2567 = vsel %vm2329, %v2566, %v2562
    %v2568 = vlaneseq
    %v2569 = vshrl.u32 %v2568, 7
    %v2570 = vsub.s32 %v2221, %v2569
    %v2571 = vrot.slane %v1900, %v2570
    %v2572 = vlaneseq
    %v2573 = vshrl.u32 %v2572, 7
    %v2574 = vsub.s32 %v2226, %v2573
    %v2575 = vrot.slane %v1903, %v2574
    %v2576 = vsel %vm2231, %v2575, %v2571
    %v2577 = vlaneseq
    %v2578 = vshrl.u32 %v2577, 7
    %v2579 = vsub.s32 %v2233, %v2578
    %v2580 = vrot.slane %v1906, %v2579
    %v2581 = vsel %vm2238, %v2580, %v2576
    %v2582 = vlaneseq
    %v2583 = vshrl.u32 %v2582, 7
    %v2584 = vsub.s32 %v2240, %v2583
    %v2585 = vrot.slane %v1909, %v2584
    %v2586 = vsel %vm2245, %v2585, %v2581
    %v2587 = vlaneseq
    %v2588 = vshrl.u32 %v2587, 7
    %v2589 = vsub.s32 %v2247, %v2588
    %v2590 = vrot.slane %v1912, %v2589
    %v2591 = vsel %vm2252, %v2590, %v2586
    %v2592 = vlaneseq
    %v2593 = vshrl.u32 %v2592, 7
    %v2594 = vsub.s32 %v2254, %v2593
    %v2595 = vrot.slane %v1915, %v2594
    %v2596 = vsel %vm2259, %v2595, %v2591
    %v2597 = vlaneseq
    %v2598 = vshrl.u32 %v2597, 7
    %v2599 = vsub.s32 %v2261, %v2598
    %v2600 = vrot.slane %v1918, %v2599
    %v2601 = vsel %vm2266, %v2600, %v2596
    %v2602 = vlaneseq
    %v2603 = vshrl.u32 %v2602, 7
    %v2604 = vsub.s32 %v2268, %v2603
    %v2605 = vrot.slane %v1921, %v2604
    %v2606 = vsel %vm2273, %v2605, %v2601
    %v2607 = vlaneseq
    %v2608 = vshrl.u32 %v2607, 7
    %v2609 = vsub.s32 %v2275, %v2608
    %v2610 = vrot.slane %v1924, %v2609
    %v2611 = vsel %vm2280, %v2610, %v2606
    %v2612 = vlaneseq
    %v2613 = vshrl.u32 %v2612, 7
    %v2614 = vsub.s32 %v2282, %v2613
    %v2615 = vrot.slane %v1927, %v2614
    %v2616 = vsel %vm2287, %v2615, %v2611
    %v2617 = vlaneseq
    %v2618 = vshrl.u32 %v2617, 7
    %v2619 = vsub.s32 %v2289, %v2618
    %v2620 = vrot.slane %v1930, %v2619
    %v2621 = vsel %vm2294, %v2620, %v2616
    %v2622 = vlaneseq
    %v2623 = vshrl.u32 %v2622, 7
    %v2624 = vsub.s32 %v2296, %v2623
    %v2625 = vrot.slane %v1933, %v2624
    %v2626 = vsel %vm2301, %v2625, %v2621
    %v2627 = vlaneseq
    %v2628 = vshrl.u32 %v2627, 7
    %v2629 = vsub.s32 %v2303, %v2628
    %v2630 = vrot.slane %v1936, %v2629
    %v2631 = vsel %vm2308, %v2630, %v2626
    %v2632 = vlaneseq
    %v2633 = vshrl.u32 %v2632, 7
    %v2634 = vsub.s32 %v2310, %v2633
    %v2635 = vrot.slane %v1939, %v2634
    %v2636 = vsel %vm2315, %v2635, %v2631
    %v2637 = vlaneseq
    %v2638 = vshrl.u32 %v2637, 7
    %v2639 = vsub.s32 %v2317, %v2638
    %v2640 = vrot.slane %v1942, %v2639
    %v2641 = vsel %vm2322, %v2640, %v2636
    %v2642 = vlaneseq
    %v2643 = vshrl.u32 %v2642, 7
    %v2644 = vsub.s32 %v2324, %v2643
    %v2645 = vrot.slane %v1945, %v2644
    %v2646 = vsel %vm2329, %v2645, %v2641
    %v2647 = vlaneseq
    %v2648 = vshrl.u32 %v2647, 7
    %v2649 = vsub.s32 %v2221, %v2648
    %v2650 = vrot.slane %v1948, %v2649
    %v2651 = vlaneseq
    %v2652 = vshrl.u32 %v2651, 7
    %v2653 = vsub.s32 %v2226, %v2652
    %v2654 = vrot.slane %v1951, %v2653
    %v2655 = vsel %vm2231, %v2654, %v2650
    %v2656 = vlaneseq
    %v2657 = vshrl.u32 %v2656, 7
    %v2658 = vsub.s32 %v2233, %v2657
    %v2659 = vrot.slane %v1954, %v2658
    %v2660 = vsel %vm2238, %v2659, %v2655
    %v2661 = vlaneseq
    %v2662 = vshrl.u32 %v2661, 7
    %v2663 = vsub.s32 %v2240, %v2662
    %v2664 = vrot.slane %v1957, %v2663
    %v2665 = vsel %vm2245, %v2664, %v2660
    %v2666 = vlaneseq
    %v2667 = vshrl.u32 %v2666, 7
    %v2668 = vsub.s32 %v2247, %v2667
    %v2669 = vrot.slane %v1960, %v2668
    %v2670 = vsel %vm2252, %v2669, %v2665
    %v2671 = vlaneseq
    %v2672 = vshrl.u32 %v2671, 7
    %v2673 = vsub.s32 %v2254, %v2672
    %v2674 = vrot.slane %v1963, %v2673
    %v2675 = vsel %vm2259, %v2674, %v2670
    %v2676 = vlaneseq
    %v2677 = vshrl.u32 %v2676, 7
    %v2678 = vsub.s32 %v2261, %v2677
    %v2679 = vrot.slane %v1966, %v2678
    %v2680 = vsel %vm2266, %v2679, %v2675
    %v2681 = vlaneseq
    %v2682 = vshrl.u32 %v2681, 7
    %v2683 = vsub.s32 %v2268, %v2682
    %v2684 = vrot.slane %v1969, %v2683
    %v2685 = vsel %vm2273, %v2684, %v2680
    %v2686 = vlaneseq
    %v2687 = vshrl.u32 %v2686, 7
    %v2688 = vsub.s32 %v2275, %v2687
    %v2689 = vrot.slane %v1972, %v2688
    %v2690 = vsel %vm2280, %v2689, %v2685
    %v2691 = vlaneseq
    %v2692 = vshrl.u32 %v2691, 7
    %v2693 = vsub.s32 %v2282, %v2692
    %v2694 = vrot.slane %v1975, %v2693
    %v2695 = vsel %vm2287, %v2694, %v2690
    %v2696 = vlaneseq
    %v2697 = vshrl.u32 %v2696, 7
    %v2698 = vsub.s32 %v2289, %v2697
    %v2699 = vrot.slane %v1978, %v2698
    %v2700 = vsel %vm2294, %v2699, %v2695
    %v2701 = vlaneseq
    %v2702 = vshrl.u32 %v2701, 7
    %v2703 = vsub.s32 %v2296, %v2702
    %v2704 = vrot.slane %v1981, %v2703
    %v2705 = vsel %vm2301, %v2704, %v2700
    %v2706 = vlaneseq
    %v2707 = vshrl.u32 %v2706, 7
    %v2708 = vsub.s32 %v2303, %v2707
    %v2709 = vrot.slane %v1984, %v2708
    %v2710 = vsel %vm2308, %v2709, %v2705
    %v2711 = vlaneseq
    %v2712 = vshrl.u32 %v2711, 7
    %v2713 = vsub.s32 %v2310, %v2712
    %v2714 = vrot.slane %v1987, %v2713
    %v2715 = vsel %vm2315, %v2714, %v2710
    %v2716 = vlaneseq
    %v2717 = vshrl.u32 %v2716, 7
    %v2718 = vsub.s32 %v2317, %v2717
    %v2719 = vrot.slane %v1990, %v2718
    %v2720 = vsel %vm2322, %v2719, %v2715
    %v2721 = vlaneseq
    %v2722 = vshrl.u32 %v2721, 7
    %v2723 = vsub.s32 %v2324, %v2722
    %v2724 = vrot.slane %v1993, %v2723
    %v2725 = vsel %vm2329, %v2724, %v2720
    %v2726 = vlaneseq
    %v2727 = vshrl.u32 %v2726, 7
    %v2728 = vsub.s32 %v2221, %v2727
    %v2729 = vrot.slane %v1996, %v2728
    %v2730 = vlaneseq
    %v2731 = vshrl.u32 %v2730, 7
    %v2732 = vsub.s32 %v2226, %v2731
    %v2733 = vrot.slane %v1999, %v2732
    %v2734 = vsel %vm2231, %v2733, %v2729
    %v2735 = vlaneseq
    %v2736 = vshrl.u32 %v2735, 7
    %v2737 = vsub.s32 %v2233, %v2736
    %v2738 = vrot.slane %v2002, %v2737
    %v2739 = vsel %vm2238, %v2738, %v2734
    %v2740 = vlaneseq
    %v2741 = vshrl.u32 %v2740, 7
    %v2742 = vsub.s32 %v2240, %v2741
    %v2743 = vrot.slane %v2005, %v2742
    %v2744 = vsel %vm2245, %v2743, %v2739
    %v2745 = vlaneseq
    %v2746 = vshrl.u32 %v2745, 7
    %v2747 = vsub.s32 %v2247, %v2746
    %v2748 = vrot.slane %v2008, %v2747
    %v2749 = vsel %vm2252, %v2748, %v2744
    %v2750 = vlaneseq
    %v2751 = vshrl.u32 %v2750, 7
    %v2752 = vsub.s32 %v2254, %v2751
    %v2753 = vrot.slane %v2011, %v2752
    %v2754 = vsel %vm2259, %v2753, %v2749
    %v2755 = vlaneseq
    %v2756 = vshrl.u32 %v2755, 7
    %v2757 = vsub.s32 %v2261, %v2756
    %v2758 = vrot.slane %v2014, %v2757
    %v2759 = vsel %vm2266, %v2758, %v2754
    %v2760 = vlaneseq
    %v2761 = vshrl.u32 %v2760, 7
    %v2762 = vsub.s32 %v2268, %v2761
    %v2763 = vrot.slane %v2017, %v2762
    %v2764 = vsel %vm2273, %v2763, %v2759
    %v2765 = vlaneseq
    %v2766 = vshrl.u32 %v2765, 7
    %v2767 = vsub.s32 %v2275, %v2766
    %v2768 = vrot.slane %v2020, %v2767
    %v2769 = vsel %vm2280, %v2768, %v2764
    %v2770 = vlaneseq
    %v2771 = vshrl.u32 %v2770, 7
    %v2772 = vsub.s32 %v2282, %v2771
    %v2773 = vrot.slane %v2023, %v2772
    %v2774 = vsel %vm2287, %v2773, %v2769
    %v2775 = vlaneseq
    %v2776 = vshrl.u32 %v2775, 7
    %v2777 = vsub.s32 %v2289, %v2776
    %v2778 = vrot.slane %v2026, %v2777
    %v2779 = vsel %vm2294, %v2778, %v2774
    %v2780 = vlaneseq
    %v2781 = vshrl.u32 %v2780, 7
    %v2782 = vsub.s32 %v2296, %v2781
    %v2783 = vrot.slane %v2029, %v2782
    %v2784 = vsel %vm2301, %v2783, %v2779
    %v2785 = vlaneseq
    %v2786 = vshrl.u32 %v2785, 7
    %v2787 = vsub.s32 %v2303, %v2786
    %v2788 = vrot.slane %v2032, %v2787
    %v2789 = vsel %vm2308, %v2788, %v2784
    %v2790 = vlaneseq
    %v2791 = vshrl.u32 %v2790, 7
    %v2792 = vsub.s32 %v2310, %v2791
    %v2793 = vrot.slane %v2035, %v2792
    %v2794 = vsel %vm2315, %v2793, %v2789
    %v2795 = vlaneseq
    %v2796 = vshrl.u32 %v2795, 7
    %v2797 = vsub.s32 %v2317, %v2796
    %v2798 = vrot.slane %v2038, %v2797
    %v2799 = vsel %vm2322, %v2798, %v2794
    %v2800 = vlaneseq
    %v2801 = vshrl.u32 %v2800, 7
    %v2802 = vsub.s32 %v2324, %v2801
    %v2803 = vrot.slane %v2041, %v2802
    %v2804 = vsel %vm2329, %v2803, %v2799
    %v2805 = vlaneseq
    %v2806 = vshrl.u32 %v2805, 7
    %v2807 = vsub.s32 %v2221, %v2806
    %v2808 = vrot.slane %v2044, %v2807
    %v2809 = vlaneseq
    %v2810 = vshrl.u32 %v2809, 7
    %v2811 = vsub.s32 %v2226, %v2810
    %v2812 = vrot.slane %v2047, %v2811
    %v2813 = vsel %vm2231, %v2812, %v2808
    %v2814 = vlaneseq
    %v2815 = vshrl.u32 %v2814, 7
    %v2816 = vsub.s32 %v2233, %v2815
    %v2817 = vrot.slane %v2050, %v2816
    %v2818 = vsel %vm2238, %v2817, %v2813
    %v2819 = vlaneseq
    %v2820 = vshrl.u32 %v2819, 7
    %v2821 = vsub.s32 %v2240, %v2820
    %v2822 = vrot.slane %v2053, %v2821
    %v2823 = vsel %vm2245, %v2822, %v2818
    %v2824 = vlaneseq
    %v2825 = vshrl.u32 %v2824, 7
    %v2826 = vsub.s32 %v2247, %v2825
    %v2827 = vrot.slane %v2056, %v2826
    %v2828 = vsel %vm2252, %v2827, %v2823
    %v2829 = vlaneseq
    %v2830 = vshrl.u32 %v2829, 7
    %v2831 = vsub.s32 %v2254, %v2830
    %v2832 = vrot.slane %v2059, %v2831
    %v2833 = vsel %vm2259, %v2832, %v2828
    %v2834 = vlaneseq
    %v2835 = vshrl.u32 %v2834, 7
    %v2836 = vsub.s32 %v2261, %v2835
    %v2837 = vrot.slane %v2062, %v2836
    %v2838 = vsel %vm2266, %v2837, %v2833
    %v2839 = vlaneseq
    %v2840 = vshrl.u32 %v2839, 7
    %v2841 = vsub.s32 %v2268, %v2840
    %v2842 = vrot.slane %v2065, %v2841
    %v2843 = vsel %vm2273, %v2842, %v2838
    %v2844 = vlaneseq
    %v2845 = vshrl.u32 %v2844, 7
    %v2846 = vsub.s32 %v2275, %v2845
    %v2847 = vrot.slane %v2068, %v2846
    %v2848 = vsel %vm2280, %v2847, %v2843
    %v2849 = vlaneseq
    %v2850 = vshrl.u32 %v2849, 7
    %v2851 = vsub.s32 %v2282, %v2850
    %v2852 = vrot.slane %v2071, %v2851
    %v2853 = vsel %vm2287, %v2852, %v2848
    %v2854 = vlaneseq
    %v2855 = vshrl.u32 %v2854, 7
    %v2856 = vsub.s32 %v2289, %v2855
    %v2857 = vrot.slane %v2074, %v2856
    %v2858 = vsel %vm2294, %v2857, %v2853
    %v2859 = vlaneseq
    %v2860 = vshrl.u32 %v2859, 7
    %v2861 = vsub.s32 %v2296, %v2860
    %v2862 = vrot.slane %v2077, %v2861
    %v2863 = vsel %vm2301, %v2862, %v2858
    %v2864 = vlaneseq
    %v2865 = vshrl.u32 %v2864, 7
    %v2866 = vsub.s32 %v2303, %v2865
    %v2867 = vrot.slane %v2080, %v2866
    %v2868 = vsel %vm2308, %v2867, %v2863
    %v2869 = vlaneseq
    %v2870 = vshrl.u32 %v2869, 7
    %v2871 = vsub.s32 %v2310, %v2870
    %v2872 = vrot.slane %v2083, %v2871
    %v2873 = vsel %vm2315, %v2872, %v2868
    %v2874 = vlaneseq
    %v2875 = vshrl.u32 %v2874, 7
    %v2876 = vsub.s32 %v2317, %v2875
    %v2877 = vrot.slane %v2086, %v2876
    %v2878 = vsel %vm2322, %v2877, %v2873
    %v2879 = vlaneseq
    %v2880 = vshrl.u32 %v2879, 7
    %v2881 = vsub.s32 %v2324, %v2880
    %v2882 = vrot.slane %v2089, %v2881
    %v2883 = vsel %vm2329, %v2882, %v2878
    %vm2884 = vcmask 1041409
    %v2885 = vsel %vm2884, %v2409, %v2330
    %vm2886 = vcmask 1042434
    %v2887 = vsel %vm2886, %v2488, %v2885
    %vm2888 = vcmask 1043459
    %v2889 = vsel %vm2888, %v2567, %v2887
    %vm2890 = vcmask 1044484
    %v2891 = vsel %vm2890, %v2646, %v2889
    %vm2892 = vcmask 1045509
    %v2893 = vsel %vm2892, %v2725, %v2891
    %vm2894 = vcmask 1046534
    %v2895 = vsel %vm2894, %v2804, %v2893
    %vm2896 = vcmask 1047559
    %v2897 = vsel %vm2896, %v2883, %v2895
    %v2899 = vsel %vm2091, %v2090, %v2897
    %s2900 = smul.u32 0, 128
    %s2901 = sadd.s32 %s2900, 0
    %s2902 = sshra.s32 %s2901, 7
    %s2903 = sand.u32 %s2901, 127
    %s2904 = scalar_lea.vmem [#allocation2], %s2902
    %2905 = vst [vmem:[%s2904] sm:$0xff] %v2899
    %p2906 = scmp.eq.s32.totalorder 0, 0
    // Predicated region
    $region22: #{tpu_custom_call.1} parent=1 // pred_check
      %p2907 = pneg %p2906
    $region23: #{tpu_custom_call.1} parent=1 // pred_check_branch
      %2909 = sbr.rel (%p2907) target = $region25
    $region24: #{tpu_custom_call.1} parent=1 // pred_region
      %v2910 = vld [vmem:[#allocation2] sm:$0xff]
      %2911 = vmax.xlane.f32.xlu0 %v2910
      %v2912 = vpop.xlane.xlu0 %2911
      %v2913 = vsub.f32 %v2910, %v2912
      %v2914 = vmul.f32 %v2913, 1.442695
      %v2915 = vpow.pop %v2914
      %2916 = vadd.xlane.f32.xlu0 %v2915
      %v2917 = vpop.xlane.xlu0 %2916
      %v2918 = vrcp.pop %v2917
      %v2919 = vmul.f32 %v2915, %v2918
      %2920 = vst [vmem:[#allocation2] sm:$0xff] %v2919
    $region25: #{tpu_custom_call.1} parent=1 // pred_fallthru
      _
    // Predicated region
    $region26: #{tpu_custom_call.1} parent=1 // pred_check
      _
    $region27: #{tpu_custom_call.1} parent=1 // pred_check_branch
      %2922 = sbr.rel (0) target = $region29
    $region28: #{tpu_custom_call.1} parent=1 // pred_region
      %s2924 = ssub.s32 128, 128
      %2925 = vsyncadd [#allocation3], %s2924
      %s2927 = sshll.u32 [#allocation2], 4
      %s2928 = int_to_ptr.vmem [resolvable:$true] %s2927
      %2930 = dma.vmem_to_hbm [thread:$0]  %s2928, 128, %s5, [#allocation3]
    $region29: #{tpu_custom_call.1} parent=1 // pred_fallthru
      _
    // Predicated region
    $region30: #{tpu_custom_call.1} parent=1 // pred_check
      _
    $region31: #{tpu_custom_call.1} parent=1 // pred_check_branch
      %2932 = sbr.rel (0) target = $region33
    $region32: #{tpu_custom_call.1} parent=1 // pred_region
      %2933 = dma.done [#allocation3], 128
    $region33: #{tpu_custom_call.1} parent=1 // pred_fallthru
      _
    %2934 = vsyncpa [#allocation3], 1

</llo_original>
